<compile_context>
chip_gen: v7x
topology: tpu7x:2x2x1
jax: 0.10.0
libtpu: 0.0.40
codegen_flags: <defaults>
</compile_context>

<pallas_src>
import functools

import jax
import jax.numpy as jnp
from jax import lax
from jax.experimental import pallas as pl
from jax.experimental.pallas import tpu as pltpu

C_OUT = 3
KH = KW = 3
EPS = 1e-5
LANES = 128
HALO_ROWS = 8          # covers in-kernel flat shifts up to 8*128 elements


def _round_up(v, m):
    return ((v + m - 1) // m) * m


def _build_views(v_ref, views_ref, block_rows, w1):
    """Rebuild the 16 (dy, dx) shifted views of the 4-parity slab in VMEM.

    views_ref[4*dy + dx][r, l] == xpad[n, 2*i + dy, 2*j + dx] where the pooled
    position (n, i, j) has flat index tile_offset + r*128 + l over the
    (N, Ho+1, Wo+1) grid.  The shift d = (dy//2)*w1 + (dx//2) is realised as a
    lane roll (XLU) plus a select against the next row, using the 8 halo rows
    of the input block.
    """
    lane = lax.broadcasted_iota(jnp.int32, (block_rows, LANES), 1)
    for py in range(2):
        for px in range(2):
            u = 2 * py + px
            for si in range(2):
                for sj in range(2):
                    d = si * w1 + sj                    # flat element shift
                    dr, dl = d // LANES, d % LANES
                    if dl == 0:
                        sv = v_ref[u, pl.ds(dr, block_rows), :]
                    else:
                        a0 = v_ref[u, pl.ds(dr, block_rows), :]
                        a1 = v_ref[u, pl.ds(dr + 1, block_rows), :]
                        r0 = pltpu.roll(a0, shift=LANES - dl, axis=1)
                        r1 = pltpu.roll(a1, shift=LANES - dl, axis=1)
                        sv = jnp.where(lane < LANES - dl, r0, r1)
                    views_ref[4 * (py + 2 * si) + (px + 2 * sj), :, :] = sv


def _conv_phase(views_ref, w_ref, ph, pw):
    """Conv output (no bias) of the pool-phase (ph, pw), for all 3 channels.

    Each view slab is loaded once per tap and reused for the 3 channels.
    """
    acc = [None] * C_OUT
    for ky in range(KH):
        for kx in range(KW):
            val = views_ref[4 * (ph + ky) + (pw + kx)]
            for oc in range(C_OUT):
                term = w_ref[oc * 9 + ky * 3 + kx] * val
                acc[oc] = term if acc[oc] is None else acc[oc] + term
    return acc


def _stats_kernel(v_ref, w_ref, out_ref, views_ref, *, block_rows, w1):
    # v_ref:     (5, BR+8, 128) VMEM  -- 4 parity planes + validity mask, +halo
    # w_ref:     (27,) SMEM           -- conv weights, idx = oc*9 + ky*3 + kx
    # out_ref:   (8, 128)  VMEM       -- rows 0-2 lane sums, 3-5 lane sum-sqs
    # views_ref: (16, BR, 128) VMEM scratch -- rebuilt shifted views
    t = pl.program_id(0)

    @pl.when(t == 0)
    def _init():
        out_ref[...] = jnp.zeros_like(out_ref)

    _build_views(v_ref, views_ref, block_rows, w1)
    mask = v_ref[4, pl.ds(0, block_rows), :]     # 1.0 on real output positions
    for ph in range(2):
        for pw in range(2):
            acc = _conv_phase(views_ref, w_ref, ph, pw)
            for oc in range(C_OUT):
                m = acc[oc] * mask
                out_ref[oc:oc + 1, :] = (
                    out_ref[oc:oc + 1, :]
                    + jnp.sum(m, axis=0, keepdims=True))
                out_ref[oc + 3:oc + 4, :] = (
                    out_ref[oc + 3:oc + 4, :]
                    + jnp.sum(m * acc[oc], axis=0, keepdims=True))


def _apply_kernel(v_ref, w_ref, sc_ref, sh_ref, out_ref, views_ref, *,
                  block_rows, w1):
    # v_ref:   (5, BR+8, 128) VMEM;  w_ref: (27,) SMEM
    # sc_ref/sh_ref: (3,) SMEM  -- fused BN scale / shift per channel
    # out_ref: (3, BR, 128) VMEM -- pooled output tile (flat lane-dense)
    _build_views(v_ref, views_ref, block_rows, w1)
    pooled = [None] * C_OUT
    for ph in range(2):
        for pw in range(2):
            acc = _conv_phase(views_ref, w_ref, ph, pw)
            for oc in range(C_OUT):
                z = acc[oc] * sc_ref[oc] + sh_ref[oc]
                pooled[oc] = z if pooled[oc] is None else jnp.maximum(pooled[oc], z)
    for oc in range(C_OUT):
        out_ref[oc, :, :] = jnp.maximum(pooled[oc], 0.0)   # ReLU folded into pool


def fe_cnn_0(x, w, b, gamma, beta, *, block_rows=None):
    """x: (N, 1, H, W) float32, H and W even. Returns (N, 3, H//2, W//2).

    `b` (conv bias) is accepted for API parity but unused inside the kernels:
    training-mode BatchNorm subtracts the batch mean, so it cancels exactly.
    """
    n, cin, h, wdt = x.shape
    assert cin == 1 and h % 2 == 0 and wdt % 2 == 0
    ho, wo = h // 2, wdt // 2
    h1, w1 = ho + 1, wo + 1
    assert wo + 2 <= HALO_ROWS * LANES, "width too large for the fixed 8-row halo"
    s_view = n * h1 * w1                       # flat positions incl. halo row/col
    count = float(n * h * wdt)                 # conv outputs per channel

    rows_min = _round_up(-(-s_view // LANES), 8)
    if block_rows is None:
        block_rows = min(512, rows_min)
    block_rows = _round_up(block_rows, 8)
    num_tiles = -(-s_view // (block_rows * LANES))
    rows_total = num_tiles * block_rows
    flat_len = rows_total * LANES + HALO_ROWS * LANES

    # ---- layout glue (XLA): pad, 4-parity space-to-depth + validity mask,
    # flatten lane-dense, and cut overlapping (BR + 8)-row tiles so the kernel
    # has the small halo it needs for its in-register +1 shifts.
    xpad = jnp.pad(x[:, 0].astype(jnp.float32), ((0, 0), (1, 1), (1, 1)))
    planes = [xpad[:, py::2, px::2] for py in range(2) for px in range(2)]
    planes.append(jnp.pad(jnp.ones((n, ho, wo), jnp.float32),
                          ((0, 0), (0, 1), (0, 1))))          # validity mask
    flat = jnp.stack([p.reshape(-1) for p in planes], axis=0)  # (5, s_view)
    flat = jnp.pad(flat, ((0, 0), (0, flat_len - s_view)))
    tiles = jnp.stack(
        [lax.slice_in_dim(flat, t * block_rows * LANES,
                          t * block_rows * LANES + (block_rows + HALO_ROWS) * LANES,
                          axis=1)
         for t in range(num_tiles)], axis=0)
    v_tiles = tiles.reshape(num_tiles, 5, block_rows + HALO_ROWS, LANES)

    w_flat = w.reshape(-1).astype(jnp.float32)   # (27,), idx = oc*9 + ky*3 + kx
    del b                                        # cancels against the batch mean

    in_spec_v = pl.BlockSpec((None, 5, block_rows + HALO_ROWS, LANES),
                             lambda t: (t, 0, 0, 0))
    smem_spec = pl.BlockSpec(memory_space=pltpu.MemorySpace.SMEM)
    vmem_limit = 32 * 1024 * 1024

    # Pass 1: per-channel lane-partial sum / sum-of-squares of the conv output.
    sums = pl.pallas_call(
        functools.partial(_stats_kernel, block_rows=block_rows, w1=w1),
        out_shape=jax.ShapeDtypeStruct((8, LANES), jnp.float32),
        grid=(num_tiles,),
        in_specs=[in_spec_v, smem_spec],
        out_specs=pl.BlockSpec((8, LANES), lambda t: (0, 0)),
        scratch_shapes=[pltpu.VMEM((16, block_rows, LANES), jnp.float32)],
        compiler_params=pltpu.CompilerParams(
            dimension_semantics=("arbitrary",),
            vmem_limit_bytes=vmem_limit),
    )(v_tiles, w_flat)

    # Tiny host-side finalize: fused BN scale/shift per channel.
    mean = jnp.sum(sums[0:3], axis=1) / count
    ex2 = jnp.sum(sums[3:6], axis=1) / count
    var = jnp.maximum(ex2 - mean * mean, 0.0)    # biased, like PyTorch BN
    scale = gamma.astype(jnp.float32) * lax.rsqrt(var + EPS)
    shift = beta.astype(jnp.float32) - mean * scale

    # Pass 2: recompute the cheap 3x3 conv, BN-affine + ReLU + 2x2 max-pool.
    out = pl.pallas_call(
        functools.partial(_apply_kernel, block_rows=block_rows, w1=w1),
        out_shape=jax.ShapeDtypeStruct((C_OUT, rows_total, LANES), jnp.float32),
        grid=(num_tiles,),
        in_specs=[in_spec_v, smem_spec, smem_spec, smem_spec],
        out_specs=pl.BlockSpec((C_OUT, block_rows, LANES), lambda t: (0, t, 0)),
        scratch_shapes=[pltpu.VMEM((16, block_rows, LANES), jnp.float32)],
        compiler_params=pltpu.CompilerParams(
            dimension_semantics=("parallel",),
            vmem_limit_bytes=vmem_limit),
    )(v_tiles, w_flat, scale, shift)

    out = out.reshape(C_OUT, rows_total * LANES)[:, :s_view]
    out = out.reshape(C_OUT, n, h1, w1)[:, :, :ho, :wo]
    return out.transpose(1, 0, 2, 3)             # -> NCHW


def reference(x, w, b, gamma, beta):
    """Plain-JAX reference mirroring the PyTorch forward (training-mode BN)."""
    y = lax.conv_general_dilated(
        x, w, window_strides=(1, 1), padding=((1, 1), (1, 1)),
        dimension_numbers=('NCHW', 'OIHW', 'NCHW'))
    y = y + b[None, :, None, None]
    mean = jnp.mean(y, axis=(0, 2, 3), keepdims=True)
    var = jnp.var(y, axis=(0, 2, 3), keepdims=True)   # biased, like PyTorch BN
    y = (y - mean) / jnp.sqrt(var + EPS)
    y = gamma[None, :, None, None] * y + beta[None, :, None, None]
    y = jnp.maximum(y, 0.0)
    y = lax.reduce_window(y, -jnp.inf, lax.max,
                          (1, 1, 2, 2), (1, 1, 2, 2), 'VALID')
    return y


if __name__ == "__main__":
    key = jax.random.PRNGKey(0)
    kx1, kx2, kx3, kw, kb = jax.random.split(key, 5)

    # Conv2d(1, 3, kernel_size=3, padding=1) params (deterministic init).
    bound = 1.0 / 3.0  # 1/sqrt(fan_in), fan_in = 1*3*3
    w = jax.random.uniform(kw, (3, 1, 3, 3), jnp.float32, -bound, bound)
    b = jax.random.uniform(kb, (3,), jnp.float32, -bound, bound)

    # BN affine params; one negative gamma exercises the scale-sign path.
    gamma = jnp.array([1.10, -0.80, 0.95], jnp.float32)
    beta = jnp.array([0.05, -0.10, 0.20], jnp.float32)

    cases = [
        (jax.random.normal(kx1, (2, 1, 16, 16), jnp.float32), None),  # 1 tile
        (jax.random.normal(kx2, (8, 1, 32, 32), jnp.float32), 8),     # 3 tiles
        (jax.random.normal(kx3, (1, 1, 8, 256), jnp.float32), None),  # wide: dr=1 path
    ]
    for x, br in cases:
        out = fe_cnn_0(x, w, b, gamma, beta, block_rows=br)
        out = jax.block_until_ready(out)
        ref = reference(x, w, b, gamma, beta)
        assert out.shape == ref.shape, (out.shape, ref.shape)
        err = float(jnp.max(jnp.abs(out - ref)))
        assert jnp.allclose(out, ref, atol=1e-4, rtol=1e-4), err

    print("KERNEL_OK")
</pallas_src>

<mosaic_0001>
module attributes {stable_mosaic.version = 11 : i64} {
  func.func @_stats_kernel(%arg0: i32, %arg1: memref<1x5x16x128xf32, #tpu.memory_space<vmem>>, %arg2: memref<27xf32, #tpu.memory_space<smem>>, %arg3: memref<8x128xf32, #tpu.memory_space<vmem>>, %arg4: memref<16x8x128xf32, #tpu.memory_space<vmem>>) attributes {dimension_semantics = [#tpu.dimension_semantics<arbitrary>], iteration_bounds = array<i64: 1>, scalar_prefetch = 0 : i64, scratch_operands = 1 : i64, tpu.core_type = #tpu.core_type<tc>, window_params = [{transform_indices = @transform_0, window_bounds = array<i64: 1, 5, 16, 128>}, {transform_indices = @transform_1, window_bounds = array<i64: 27>}, {pipeline_mode = #tpu.pipeline_mode<synchronous>, transform_indices = @transform_2, window_bounds = array<i64: 8, 128>}]} {
    %c0_i32 = arith.constant 0 : i32
    %0 = arith.cmpi eq, %arg0, %c0_i32 : i32
    %1 = arith.extui %0 : i1 to i32
    %c0_i32_0 = arith.constant 0 : i32
    %2 = arith.cmpi ne, %1, %c0_i32_0 : i32
    scf.if %2 {
      %cst_506 = arith.constant 0.000000e+00 : f32
      %806 = vector.broadcast %cst_506 : f32 to vector<8x128xf32>
      %c0_507 = arith.constant 0 : index
      %c0_508 = arith.constant 0 : index
      %807 = vector.load %arg3[%c0_507, %c0_508] : memref<8x128xf32, #tpu.memory_space<vmem>>, vector<8x128xf32>
      tpu.vector_store %arg3[%c0_507, %c0_508], %806 {strides = array<i32>} : memref<8x128xf32, #tpu.memory_space<vmem>>, vector<8x128xf32>,
    } else {
    }
    %3 = tpu.iota {dimensions = array<i32: 1>} : vector<8x128xi32>
    %c0 = arith.constant 0 : index
    %c0_1 = arith.constant 0 : index
    %c0_2 = arith.constant 0 : index
    %c0_3 = arith.constant 0 : index
    %4 = vector.load %arg1[%c0, %c0_1, %c0_2, %c0_3] : memref<1x5x16x128xf32, #tpu.memory_space<vmem>>, vector<1x1x8x128xf32>
    %5 = vector.shape_cast %4 : vector<1x1x8x128xf32> to vector<8x128xf32>
    %c0_4 = arith.constant 0 : index
    %c0_5 = arith.constant 0 : index
    %c0_6 = arith.constant 0 : index
    %6 = vector.load %arg4[%c0_4, %c0_5, %c0_6] : memref<16x8x128xf32, #tpu.memory_space<vmem>>, vector<1x8x128xf32>
    %7 = vector.shape_cast %6 : vector<1x8x128xf32> to vector<8x128xf32>
    %8 = vector.shape_cast %5 : vector<8x128xf32> to vector<1x8x128xf32>
    tpu.vector_store %arg4[%c0_4, %c0_5, %c0_6], %8 {strides = array<i32>} : memref<16x8x128xf32, #tpu.memory_space<vmem>>, vector<1x8x128xf32>,
    %c0_7 = arith.constant 0 : index
    %c0_8 = arith.constant 0 : index
    %c0_9 = arith.constant 0 : index
    %c0_10 = arith.constant 0 : index
    %9 = vector.load %arg1[%c0_7, %c0_8, %c0_9, %c0_10] : memref<1x5x16x128xf32, #tpu.memory_space<vmem>>, vector<1x1x8x128xf32>
    %10 = vector.shape_cast %9 : vector<1x1x8x128xf32> to vector<8x128xf32>
    %c0_11 = arith.constant 0 : index
    %c0_12 = arith.constant 0 : index
    %c1 = arith.constant 1 : index
    %c0_13 = arith.constant 0 : index
    %11 = vector.load %arg1[%c0_11, %c0_12, %c1, %c0_13] : memref<1x5x16x128xf32, #tpu.memory_space<vmem>>, vector<1x1x8x128xf32>
    %12 = vector.shape_cast %11 : vector<1x1x8x128xf32> to vector<8x128xf32>
    %c127_i32 = arith.constant 127 : i32
    %13 = tpu.dynamic_rotate %10 by %c127_i32 dim 1 : vector<8x128xf32>, i32 -> vector<8x128xf32>
    %c127_i32_14 = arith.constant 127 : i32
    %14 = tpu.dynamic_rotate %12 by %c127_i32_14 dim 1 : vector<8x128xf32>, i32 -> vector<8x128xf32>
    %c127_i32_15 = arith.constant 127 : i32
    %15 = vector.broadcast %c127_i32_15 : i32 to vector<8x128xi32>
    %16 = arith.cmpi slt, %3, %15 : vector<8x128xi32>
    %17 = arith.select %16, %13, %14 : vector<8x128xi1>, vector<8x128xf32>
    %c2 = arith.constant 2 : index
    %c0_16 = arith.constant 0 : index
    %c0_17 = arith.constant 0 : index
    %18 = vector.load %arg4[%c2, %c0_16, %c0_17] : memref<16x8x128xf32, #tpu.memory_space<vmem>>, vector<1x8x128xf32>
    %19 = vector.shape_cast %18 : vector<1x8x128xf32> to vector<8x128xf32>
    %20 = vector.shape_cast %17 : vector<8x128xf32> to vector<1x8x128xf32>
    tpu.vector_store %arg4[%c2, %c0_16, %c0_17], %20 {strides = array<i32>} : memref<16x8x128xf32, #tpu.memory_space<vmem>>, vector<1x8x128xf32>,
    %c0_18 = arith.constant 0 : index
    %c0_19 = arith.constant 0 : index
    %c0_20 = arith.constant 0 : index
    %c0_21 = arith.constant 0 : index
    %21 = vector.load %arg1[%c0_18, %c0_19, %c0_20, %c0_21] : memref<1x5x16x128xf32, #tpu.memory_space<vmem>>, vector<1x1x8x128xf32>
    %22 = vector.shape_cast %21 : vector<1x1x8x128xf32> to vector<8x128xf32>
    %c0_22 = arith.constant 0 : index
    %c0_23 = arith.constant 0 : index
    %c1_24 = arith.constant 1 : index
    %c0_25 = arith.constant 0 : index
    %23 = vector.load %arg1[%c0_22, %c0_23, %c1_24, %c0_25] : memref<1x5x16x128xf32, #tpu.memory_space<vmem>>, vector<1x1x8x128xf32>
    %24 = vector.shape_cast %23 : vector<1x1x8x128xf32> to vector<8x128xf32>
    %c119_i32 = arith.constant 119 : i32
    %25 = tpu.dynamic_rotate %22 by %c119_i32 dim 1 : vector<8x128xf32>, i32 -> vector<8x128xf32>
    %c119_i32_26 = arith.constant 119 : i32
    %26 = tpu.dynamic_rotate %24 by %c119_i32_26 dim 1 : vector<8x128xf32>, i32 -> vector<8x128xf32>
    %c119_i32_27 = arith.constant 119 : i32
    %27 = vector.broadcast %c119_i32_27 : i32 to vector<8x128xi32>
    %28 = arith.cmpi slt, %3, %27 : vector<8x128xi32>
    %29 = arith.select %28, %25, %26 : vector<8x128xi1>, vector<8x128xf32>
    %c8 = arith.constant 8 : index
    %c0_28 = arith.constant 0 : index
    %c0_29 = arith.constant 0 : index
    %30 = vector.load %arg4[%c8, %c0_28, %c0_29] : memref<16x8x128xf32, #tpu.memory_space<vmem>>, vector<1x8x128xf32>
    %31 = vector.shape_cast %30 : vector<1x8x128xf32> to vector<8x128xf32>
    %32 = vector.shape_cast %29 : vector<8x128xf32> to vector<1x8x128xf32>
    tpu.vector_store %arg4[%c8, %c0_28, %c0_29], %32 {strides = array<i32>} : memref<16x8x128xf32, #tpu.memory_space<vmem>>, vector<1x8x128xf32>,
    %c0_30 = arith.constant 0 : index
    %c0_31 = arith.constant 0 : index
    %c0_32 = arith.constant 0 : index
    %c0_33 = arith.constant 0 : index
    %33 = vector.load %arg1[%c0_30, %c0_31, %c0_32, %c0_33] : memref<1x5x16x128xf32, #tpu.memory_space<vmem>>, vector<1x1x8x128xf32>
    %34 = vector.shape_cast %33 : vector<1x1x8x128xf32> to vector<8x128xf32>
    %c0_34 = arith.constant 0 : index
    %c0_35 = arith.constant 0 : index
    %c1_36 = arith.constant 1 : index
    %c0_37 = arith.constant 0 : index
    %35 = vector.load %arg1[%c0_34, %c0_35, %c1_36, %c0_37] : memref<1x5x16x128xf32, #tpu.memory_space<vmem>>, vector<1x1x8x128xf32>
    %36 = vector.shape_cast %35 : vector<1x1x8x128xf32> to vector<8x128xf32>
    %c118_i32 = arith.constant 118 : i32
    %37 = tpu.dynamic_rotate %34 by %c118_i32 dim 1 : vector<8x128xf32>, i32 -> vector<8x128xf32>
    %c118_i32_38 = arith.constant 118 : i32
    %38 = tpu.dynamic_rotate %36 by %c118_i32_38 dim 1 : vector<8x128xf32>, i32 -> vector<8x128xf32>
    %c118_i32_39 = arith.constant 118 : i32
    %39 = vector.broadcast %c118_i32_39 : i32 to vector<8x128xi32>
    %40 = arith.cmpi slt, %3, %39 : vector<8x128xi32>
    %41 = arith.select %40, %37, %38 : vector<8x128xi1>, vector<8x128xf32>
    %c10 = arith.constant 10 : index
    %c0_40 = arith.constant 0 : index
    %c0_41 = arith.constant 0 : index
    %42 = vector.load %arg4[%c10, %c0_40, %c0_41] : memref<16x8x128xf32, #tpu.memory_space<vmem>>, vector<1x8x128xf32>
    %43 = vector.shape_cast %42 : vector<1x8x128xf32> to vector<8x128xf32>
    %44 = vector.shape_cast %41 : vector<8x128xf32> to vector<1x8x128xf32>
    tpu.vector_store %arg4[%c10, %c0_40, %c0_41], %44 {strides = array<i32>} : memref<16x8x128xf32, #tpu.memory_space<vmem>>, vector<1x8x128xf32>,
    %c0_42 = arith.constant 0 : index
    %c1_43 = arith.constant 1 : index
    %c0_44 = arith.constant 0 : index
    %c0_45 = arith.constant 0 : index
    %45 = vector.load %arg1[%c0_42, %c1_43, %c0_44, %c0_45] : memref<1x5x16x128xf32, #tpu.memory_space<vmem>>, vector<1x1x8x128xf32>
    %46 = vector.shape_cast %45 : vector<1x1x8x128xf32> to vector<8x128xf32>
    %c1_46 = arith.constant 1 : index
    %c0_47 = arith.constant 0 : index
    %c0_48 = arith.constant 0 : index
    %47 = vector.load %arg4[%c1_46, %c0_47, %c0_48] : memref<16x8x128xf32, #tpu.memory_space<vmem>>, vector<1x8x128xf32>
    %48 = vector.shape_cast %47 : vector<1x8x128xf32> to vector<8x128xf32>
    %49 = vector.shape_cast %46 : vector<8x128xf32> to vector<1x8x128xf32>
    tpu.vector_store %arg4[%c1_46, %c0_47, %c0_48], %49 {strides = array<i32>} : memref<16x8x128xf32, #tpu.memory_space<vmem>>, vector<1x8x128xf32>,
    %c0_49 = arith.constant 0 : index
    %c1_50 = arith.constant 1 : index
    %c0_51 = arith.constant 0 : index
    %c0_52 = arith.constant 0 : index
    %50 = vector.load %arg1[%c0_49, %c1_50, %c0_51, %c0_52] : memref<1x5x16x128xf32, #tpu.memory_space<vmem>>, vector<1x1x8x128xf32>
    %51 = vector.shape_cast %50 : vector<1x1x8x128xf32> to vector<8x128xf32>
    %c0_53 = arith.constant 0 : index
    %c1_54 = arith.constant 1 : index
    %c1_55 = arith.constant 1 : index
    %c0_56 = arith.constant 0 : index
    %52 = vector.load %arg1[%c0_53, %c1_54, %c1_55, %c0_56] : memref<1x5x16x128xf32, #tpu.memory_space<vmem>>, vector<1x1x8x128xf32>
    %53 = vector.shape_cast %52 : vector<1x1x8x128xf32> to vector<8x128xf32>
    %c127_i32_57 = arith.constant 127 : i32
    %54 = tpu.dynamic_rotate %51 by %c127_i32_57 dim 1 : vector<8x128xf32>, i32 -> vector<8x128xf32>
    %c127_i32_58 = arith.constant 127 : i32
    %55 = tpu.dynamic_rotate %53 by %c127_i32_58 dim 1 : vector<8x128xf32>, i32 -> vector<8x128xf32>
    %c127_i32_59 = arith.constant 127 : i32
    %56 = vector.broadcast %c127_i32_59 : i32 to vector<8x128xi32>
    %57 = arith.cmpi slt, %3, %56 : vector<8x128xi32>
    %58 = arith.select %57, %54, %55 : vector<8x128xi1>, vector<8x128xf32>
    %c3 = arith.constant 3 : index
    %c0_60 = arith.constant 0 : index
    %c0_61 = arith.constant 0 : index
    %59 = vector.load %arg4[%c3, %c0_60, %c0_61] : memref<16x8x128xf32, #tpu.memory_space<vmem>>, vector<1x8x128xf32>
    %60 = vector.shape_cast %59 : vector<1x8x128xf32> to vector<8x128xf32>
    %61 = vector.shape_cast %58 : vector<8x128xf32> to vector<1x8x128xf32>
    tpu.vector_store %arg4[%c3, %c0_60, %c0_61], %61 {strides = array<i32>} : memref<16x8x128xf32, #tpu.memory_space<vmem>>, vector<1x8x128xf32>,
    %c0_62 = arith.constant 0 : index
    %c1_63 = arith.constant 1 : index
    %c0_64 = arith.constant 0 : index
    %c0_65 = arith.constant 0 : index
    %62 = vector.load %arg1[%c0_62, %c1_63, %c0_64, %c0_65] : memref<1x5x16x128xf32, #tpu.memory_space<vmem>>, vector<1x1x8x128xf32>
    %63 = vector.shape_cast %62 : vector<1x1x8x128xf32> to vector<8x128xf32>
    %c0_66 = arith.constant 0 : index
    %c1_67 = arith.constant 1 : index
    %c1_68 = arith.constant 1 : index
    %c0_69 = arith.constant 0 : index
    %64 = vector.load %arg1[%c0_66, %c1_67, %c1_68, %c0_69] : memref<1x5x16x128xf32, #tpu.memory_space<vmem>>, vector<1x1x8x128xf32>
    %65 = vector.shape_cast %64 : vector<1x1x8x128xf32> to vector<8x128xf32>
    %c119_i32_70 = arith.constant 119 : i32
    %66 = tpu.dynamic_rotate %63 by %c119_i32_70 dim 1 : vector<8x128xf32>, i32 -> vector<8x128xf32>
    %c119_i32_71 = arith.constant 119 : i32
    %67 = tpu.dynamic_rotate %65 by %c119_i32_71 dim 1 : vector<8x128xf32>, i32 -> vector<8x128xf32>
    %c119_i32_72 = arith.constant 119 : i32
    %68 = vector.broadcast %c119_i32_72 : i32 to vector<8x128xi32>
    %69 = arith.cmpi slt, %3, %68 : vector<8x128xi32>
    %70 = arith.select %69, %66, %67 : vector<8x128xi1>, vector<8x128xf32>
    %c9 = arith.constant 9 : index
    %c0_73 = arith.constant 0 : index
    %c0_74 = arith.constant 0 : index
    %71 = vector.load %arg4[%c9, %c0_73, %c0_74] : memref<16x8x128xf32, #tpu.memory_space<vmem>>, vector<1x8x128xf32>
    %72 = vector.shape_cast %71 : vector<1x8x128xf32> to vector<8x128xf32>
    %73 = vector.shape_cast %70 : vector<8x128xf32> to vector<1x8x128xf32>
    tpu.vector_store %arg4[%c9, %c0_73, %c0_74], %73 {strides = array<i32>} : memref<16x8x128xf32, #tpu.memory_space<vmem>>, vector<1x8x128xf32>,
    %c0_75 = arith.constant 0 : index
    %c1_76 = arith.constant 1 : index
    %c0_77 = arith.constant 0 : index
    %c0_78 = arith.constant 0 : index
    %74 = vector.load %arg1[%c0_75, %c1_76, %c0_77, %c0_78] : memref<1x5x16x128xf32, #tpu.memory_space<vmem>>, vector<1x1x8x128xf32>
    %75 = vector.shape_cast %74 : vector<1x1x8x128xf32> to vector<8x128xf32>
    %c0_79 = arith.constant 0 : index
    %c1_80 = arith.constant 1 : index
    %c1_81 = arith.constant 1 : index
    %c0_82 = arith.constant 0 : index
    %76 = vector.load %arg1[%c0_79, %c1_80, %c1_81, %c0_82] : memref<1x5x16x128xf32, #tpu.memory_space<vmem>>, vector<1x1x8x128xf32>
    %77 = vector.shape_cast %76 : vector<1x1x8x128xf32> to vector<8x128xf32>
    %c118_i32_83 = arith.constant 118 : i32
    %78 = tpu.dynamic_rotate %75 by %c118_i32_83 dim 1 : vector<8x128xf32>, i32 -> vector<8x128xf32>
    %c118_i32_84 = arith.constant 118 : i32
    %79 = tpu.dynamic_rotate %77 by %c118_i32_84 dim 1 : vector<8x128xf32>, i32 -> vector<8x128xf32>
    %c118_i32_85 = arith.constant 118 : i32
    %80 = vector.broadcast %c118_i32_85 : i32 to vector<8x128xi32>
    %81 = arith.cmpi slt, %3, %80 : vector<8x128xi32>
    %82 = arith.select %81, %78, %79 : vector<8x128xi1>, vector<8x128xf32>
    %c11 = arith.constant 11 : index
    %c0_86 = arith.constant 0 : index
    %c0_87 = arith.constant 0 : index
    %83 = vector.load %arg4[%c11, %c0_86, %c0_87] : memref<16x8x128xf32, #tpu.memory_space<vmem>>, vector<1x8x128xf32>
    %84 = vector.shape_cast %83 : vector<1x8x128xf32> to vector<8x128xf32>
    %85 = vector.shape_cast %82 : vector<8x128xf32> to vector<1x8x128xf32>
    tpu.vector_store %arg4[%c11, %c0_86, %c0_87], %85 {strides = array<i32>} : memref<16x8x128xf32, #tpu.memory_space<vmem>>, vector<1x8x128xf32>,
    %c0_88 = arith.constant 0 : index
    %c2_89 = arith.constant 2 : index
    %c0_90 = arith.constant 0 : index
    %c0_91 = arith.constant 0 : index
    %86 = vector.load %arg1[%c0_88, %c2_89, %c0_90, %c0_91] : memref<1x5x16x128xf32, #tpu.memory_space<vmem>>, vector<1x1x8x128xf32>
    %87 = vector.shape_cast %86 : vector<1x1x8x128xf32> to vector<8x128xf32>
    %c4 = arith.constant 4 : index
    %c0_92 = arith.constant 0 : index
    %c0_93 = arith.constant 0 : index
    %88 = vector.load %arg4[%c4, %c0_92, %c0_93] : memref<16x8x128xf32, #tpu.memory_space<vmem>>, vector<1x8x128xf32>
    %89 = vector.shape_cast %88 : vector<1x8x128xf32> to vector<8x128xf32>
    %90 = vector.shape_cast %87 : vector<8x128xf32> to vector<1x8x128xf32>
    tpu.vector_store %arg4[%c4, %c0_92, %c0_93], %90 {strides = array<i32>} : memref<16x8x128xf32, #tpu.memory_space<vmem>>, vector<1x8x128xf32>,
    %c0_94 = arith.constant 0 : index
    %c2_95 = arith.constant 2 : index
    %c0_96 = arith.constant 0 : index
    %c0_97 = arith.constant 0 : index
    %91 = vector.load %arg1[%c0_94, %c2_95, %c0_96, %c0_97] : memref<1x5x16x128xf32, #tpu.memory_space<vmem>>, vector<1x1x8x128xf32>
    %92 = vector.shape_cast %91 : vector<1x1x8x128xf32> to vector<8x128xf32>
    %c0_98 = arith.constant 0 : index
    %c2_99 = arith.constant 2 : index
    %c1_100 = arith.constant 1 : index
    %c0_101 = arith.constant 0 : index
    %93 = vector.load %arg1[%c0_98, %c2_99, %c1_100, %c0_101] : memref<1x5x16x128xf32, #tpu.memory_space<vmem>>, vector<1x1x8x128xf32>
    %94 = vector.shape_cast %93 : vector<1x1x8x128xf32> to vector<8x128xf32>
    %c127_i32_102 = arith.constant 127 : i32
    %95 = tpu.dynamic_rotate %92 by %c127_i32_102 dim 1 : vector<8x128xf32>, i32 -> vector<8x128xf32>
    %c127_i32_103 = arith.constant 127 : i32
    %96 = tpu.dynamic_rotate %94 by %c127_i32_103 dim 1 : vector<8x128xf32>, i32 -> vector<8x128xf32>
    %c127_i32_104 = arith.constant 127 : i32
    %97 = vector.broadcast %c127_i32_104 : i32 to vector<8x128xi32>
    %98 = arith.cmpi slt, %3, %97 : vector<8x128xi32>
    %99 = arith.select %98, %95, %96 : vector<8x128xi1>, vector<8x128xf32>
    %c6 = arith.constant 6 : index
    %c0_105 = arith.constant 0 : index
    %c0_106 = arith.constant 0 : index
    %100 = vector.load %arg4[%c6, %c0_105, %c0_106] : memref<16x8x128xf32, #tpu.memory_space<vmem>>, vector<1x8x128xf32>
    %101 = vector.shape_cast %100 : vector<1x8x128xf32> to vector<8x128xf32>
    %102 = vector.shape_cast %99 : vector<8x128xf32> to vector<1x8x128xf32>
    tpu.vector_store %arg4[%c6, %c0_105, %c0_106], %102 {strides = array<i32>} : memref<16x8x128xf32, #tpu.memory_space<vmem>>, vector<1x8x128xf32>,
    %c0_107 = arith.constant 0 : index
    %c2_108 = arith.constant 2 : index
    %c0_109 = arith.constant 0 : index
    %c0_110 = arith.constant 0 : index
    %103 = vector.load %arg1[%c0_107, %c2_108, %c0_109, %c0_110] : memref<1x5x16x128xf32, #tpu.memory_space<vmem>>, vector<1x1x8x128xf32>
    %104 = vector.shape_cast %103 : vector<1x1x8x128xf32> to vector<8x128xf32>
    %c0_111 = arith.constant 0 : index
    %c2_112 = arith.constant 2 : index
    %c1_113 = arith.constant 1 : index
    %c0_114 = arith.constant 0 : index
    %105 = vector.load %arg1[%c0_111, %c2_112, %c1_113, %c0_114] : memref<1x5x16x128xf32, #tpu.memory_space<vmem>>, vector<1x1x8x128xf32>
    %106 = vector.shape_cast %105 : vector<1x1x8x128xf32> to vector<8x128xf32>
    %c119_i32_115 = arith.constant 119 : i32
    %107 = tpu.dynamic_rotate %104 by %c119_i32_115 dim 1 : vector<8x128xf32>, i32 -> vector<8x128xf32>
    %c119_i32_116 = arith.constant 119 : i32
    %108 = tpu.dynamic_rotate %106 by %c119_i32_116 dim 1 : vector<8x128xf32>, i32 -> vector<8x128xf32>
    %c119_i32_117 = arith.constant 119 : i32
    %109 = vector.broadcast %c119_i32_117 : i32 to vector<8x128xi32>
    %110 = arith.cmpi slt, %3, %109 : vector<8x128xi32>
    %111 = arith.select %110, %107, %108 : vector<8x128xi1>, vector<8x128xf32>
    %c12 = arith.constant 12 : index
    %c0_118 = arith.constant 0 : index
    %c0_119 = arith.constant 0 : index
    %112 = vector.load %arg4[%c12, %c0_118, %c0_119] : memref<16x8x128xf32, #tpu.memory_space<vmem>>, vector<1x8x128xf32>
    %113 = vector.shape_cast %112 : vector<1x8x128xf32> to vector<8x128xf32>
    %114 = vector.shape_cast %111 : vector<8x128xf32> to vector<1x8x128xf32>
    tpu.vector_store %arg4[%c12, %c0_118, %c0_119], %114 {strides = array<i32>} : memref<16x8x128xf32, #tpu.memory_space<vmem>>, vector<1x8x128xf32>,
    %c0_120 = arith.constant 0 : index
    %c2_121 = arith.constant 2 : index
    %c0_122 = arith.constant 0 : index
    %c0_123 = arith.constant 0 : index
    %115 = vector.load %arg1[%c0_120, %c2_121, %c0_122, %c0_123] : memref<1x5x16x128xf32, #tpu.memory_space<vmem>>, vector<1x1x8x128xf32>
    %116 = vector.shape_cast %115 : vector<1x1x8x128xf32> to vector<8x128xf32>
    %c0_124 = arith.constant 0 : index
    %c2_125 = arith.constant 2 : index
    %c1_126 = arith.constant 1 : index
    %c0_127 = arith.constant 0 : index
    %117 = vector.load %arg1[%c0_124, %c2_125, %c1_126, %c0_127] : memref<1x5x16x128xf32, #tpu.memory_space<vmem>>, vector<1x1x8x128xf32>
    %118 = vector.shape_cast %117 : vector<1x1x8x128xf32> to vector<8x128xf32>
    %c118_i32_128 = arith.constant 118 : i32
    %119 = tpu.dynamic_rotate %116 by %c118_i32_128 dim 1 : vector<8x128xf32>, i32 -> vector<8x128xf32>
    %c118_i32_129 = arith.constant 118 : i32
    %120 = tpu.dynamic_rotate %118 by %c118_i32_129 dim 1 : vector<8x128xf32>, i32 -> vector<8x128xf32>
    %c118_i32_130 = arith.constant 118 : i32
    %121 = vector.broadcast %c118_i32_130 : i32 to vector<8x128xi32>
    %122 = arith.cmpi slt, %3, %121 : vector<8x128xi32>
    %123 = arith.select %122, %119, %120 : vector<8x128xi1>, vector<8x128xf32>
    %c14 = arith.constant 14 : index
    %c0_131 = arith.constant 0 : index
    %c0_132 = arith.constant 0 : index
    %124 = vector.load %arg4[%c14, %c0_131, %c0_132] : memref<16x8x128xf32, #tpu.memory_space<vmem>>, vector<1x8x128xf32>
    %125 = vector.shape_cast %124 : vector<1x8x128xf32> to vector<8x128xf32>
    %126 = vector.shape_cast %123 : vector<8x128xf32> to vector<1x8x128xf32>
    tpu.vector_store %arg4[%c14, %c0_131, %c0_132], %126 {strides = array<i32>} : memref<16x8x128xf32, #tpu.memory_space<vmem>>, vector<1x8x128xf32>,
    %c0_133 = arith.constant 0 : index
    %c3_134 = arith.constant 3 : index
    %c0_135 = arith.constant 0 : index
    %c0_136 = arith.constant 0 : index
    %127 = vector.load %arg1[%c0_133, %c3_134, %c0_135, %c0_136] : memref<1x5x16x128xf32, #tpu.memory_space<vmem>>, vector<1x1x8x128xf32>
    %128 = vector.shape_cast %127 : vector<1x1x8x128xf32> to vector<8x128xf32>
    %c5 = arith.constant 5 : index
    %c0_137 = arith.constant 0 : index
    %c0_138 = arith.constant 0 : index
    %129 = vector.load %arg4[%c5, %c0_137, %c0_138] : memref<16x8x128xf32, #tpu.memory_space<vmem>>, vector<1x8x128xf32>
    %130 = vector.shape_cast %129 : vector<1x8x128xf32> to vector<8x128xf32>
    %131 = vector.shape_cast %128 : vector<8x128xf32> to vector<1x8x128xf32>
    tpu.vector_store %arg4[%c5, %c0_137, %c0_138], %131 {strides = array<i32>} : memref<16x8x128xf32, #tpu.memory_space<vmem>>, vector<1x8x128xf32>,
    %c0_139 = arith.constant 0 : index
    %c3_140 = arith.constant 3 : index
    %c0_141 = arith.constant 0 : index
    %c0_142 = arith.constant 0 : index
    %132 = vector.load %arg1[%c0_139, %c3_140, %c0_141, %c0_142] : memref<1x5x16x128xf32, #tpu.memory_space<vmem>>, vector<1x1x8x128xf32>
    %133 = vector.shape_cast %132 : vector<1x1x8x128xf32> to vector<8x128xf32>
    %c0_143 = arith.constant 0 : index
    %c3_144 = arith.constant 3 : index
    %c1_145 = arith.constant 1 : index
    %c0_146 = arith.constant 0 : index
    %134 = vector.load %arg1[%c0_143, %c3_144, %c1_145, %c0_146] : memref<1x5x16x128xf32, #tpu.memory_space<vmem>>, vector<1x1x8x128xf32>
    %135 = vector.shape_cast %134 : vector<1x1x8x128xf32> to vector<8x128xf32>
    %c127_i32_147 = arith.constant 127 : i32
    %136 = tpu.dynamic_rotate %133 by %c127_i32_147 dim 1 : vector<8x128xf32>, i32 -> vector<8x128xf32>
    %c127_i32_148 = arith.constant 127 : i32
    %137 = tpu.dynamic_rotate %135 by %c127_i32_148 dim 1 : vector<8x128xf32>, i32 -> vector<8x128xf32>
    %c127_i32_149 = arith.constant 127 : i32
    %138 = vector.broadcast %c127_i32_149 : i32 to vector<8x128xi32>
    %139 = arith.cmpi slt, %3, %138 : vector<8x128xi32>
    %140 = arith.select %139, %136, %137 : vector<8x128xi1>, vector<8x128xf32>
    %c7 = arith.constant 7 : index
    %c0_150 = arith.constant 0 : index
    %c0_151 = arith.constant 0 : index
    %141 = vector.load %arg4[%c7, %c0_150, %c0_151] : memref<16x8x128xf32, #tpu.memory_space<vmem>>, vector<1x8x128xf32>
    %142 = vector.shape_cast %141 : vector<1x8x128xf32> to vector<8x128xf32>
    %143 = vector.shape_cast %140 : vector<8x128xf32> to vector<1x8x128xf32>
    tpu.vector_store %arg4[%c7, %c0_150, %c0_151], %143 {strides = array<i32>} : memref<16x8x128xf32, #tpu.memory_space<vmem>>, vector<1x8x128xf32>,
    %c0_152 = arith.constant 0 : index
    %c3_153 = arith.constant 3 : index
    %c0_154 = arith.constant 0 : index
    %c0_155 = arith.constant 0 : index
    %144 = vector.load %arg1[%c0_152, %c3_153, %c0_154, %c0_155] : memref<1x5x16x128xf32, #tpu.memory_space<vmem>>, vector<1x1x8x128xf32>
    %145 = vector.shape_cast %144 : vector<1x1x8x128xf32> to vector<8x128xf32>
    %c0_156 = arith.constant 0 : index
    %c3_157 = arith.constant 3 : index
    %c1_158 = arith.constant 1 : index
    %c0_159 = arith.constant 0 : index
    %146 = vector.load %arg1[%c0_156, %c3_157, %c1_158, %c0_159] : memref<1x5x16x128xf32, #tpu.memory_space<vmem>>, vector<1x1x8x128xf32>
    %147 = vector.shape_cast %146 : vector<1x1x8x128xf32> to vector<8x128xf32>
    %c119_i32_160 = arith.constant 119 : i32
    %148 = tpu.dynamic_rotate %145 by %c119_i32_160 dim 1 : vector<8x128xf32>, i32 -> vector<8x128xf32>
    %c119_i32_161 = arith.constant 119 : i32
    %149 = tpu.dynamic_rotate %147 by %c119_i32_161 dim 1 : vector<8x128xf32>, i32 -> vector<8x128xf32>
    %c119_i32_162 = arith.constant 119 : i32
    %150 = vector.broadcast %c119_i32_162 : i32 to vector<8x128xi32>
    %151 = arith.cmpi slt, %3, %150 : vector<8x128xi32>
    %152 = arith.select %151, %148, %149 : vector<8x128xi1>, vector<8x128xf32>
    %c13 = arith.constant 13 : index
    %c0_163 = arith.constant 0 : index
    %c0_164 = arith.constant 0 : index
    %153 = vector.load %arg4[%c13, %c0_163, %c0_164] : memref<16x8x128xf32, #tpu.memory_space<vmem>>, vector<1x8x128xf32>
    %154 = vector.shape_cast %153 : vector<1x8x128xf32> to vector<8x128xf32>
    %155 = vector.shape_cast %152 : vector<8x128xf32> to vector<1x8x128xf32>
    tpu.vector_store %arg4[%c13, %c0_163, %c0_164], %155 {strides = array<i32>} : memref<16x8x128xf32, #tpu.memory_space<vmem>>, vector<1x8x128xf32>,
    %c0_165 = arith.constant 0 : index
    %c3_166 = arith.constant 3 : index
    %c0_167 = arith.constant 0 : index
    %c0_168 = arith.constant 0 : index
    %156 = vector.load %arg1[%c0_165, %c3_166, %c0_167, %c0_168] : memref<1x5x16x128xf32, #tpu.memory_space<vmem>>, vector<1x1x8x128xf32>
    %157 = vector.shape_cast %156 : vector<1x1x8x128xf32> to vector<8x128xf32>
    %c0_169 = arith.constant 0 : index
    %c3_170 = arith.constant 3 : index
    %c1_171 = arith.constant 1 : index
    %c0_172 = arith.constant 0 : index
    %158 = vector.load %arg1[%c0_169, %c3_170, %c1_171, %c0_172] : memref<1x5x16x128xf32, #tpu.memory_space<vmem>>, vector<1x1x8x128xf32>
    %159 = vector.shape_cast %158 : vector<1x1x8x128xf32> to vector<8x128xf32>
    %c118_i32_173 = arith.constant 118 : i32
    %160 = tpu.dynamic_rotate %157 by %c118_i32_173 dim 1 : vector<8x128xf32>, i32 -> vector<8x128xf32>
    %c118_i32_174 = arith.constant 118 : i32
    %161 = tpu.dynamic_rotate %159 by %c118_i32_174 dim 1 : vector<8x128xf32>, i32 -> vector<8x128xf32>
    %c118_i32_175 = arith.constant 118 : i32
    %162 = vector.broadcast %c118_i32_175 : i32 to vector<8x128xi32>
    %163 = arith.cmpi slt, %3, %162 : vector<8x128xi32>
    %164 = arith.select %163, %160, %161 : vector<8x128xi1>, vector<8x128xf32>
    %c15 = arith.constant 15 : index
    %c0_176 = arith.constant 0 : index
    %c0_177 = arith.constant 0 : index
    %165 = vector.load %arg4[%c15, %c0_176, %c0_177] : memref<16x8x128xf32, #tpu.memory_space<vmem>>, vector<1x8x128xf32>
    %166 = vector.shape_cast %165 : vector<1x8x128xf32> to vector<8x128xf32>
    %167 = vector.shape_cast %164 : vector<8x128xf32> to vector<1x8x128xf32>
    tpu.vector_store %arg4[%c15, %c0_176, %c0_177], %167 {strides = array<i32>} : memref<16x8x128xf32, #tpu.memory_space<vmem>>, vector<1x8x128xf32>,
    %c0_178 = arith.constant 0 : index
    %c4_179 = arith.constant 4 : index
    %c0_180 = arith.constant 0 : index
    %c0_181 = arith.constant 0 : index
    %168 = vector.load %arg1[%c0_178, %c4_179, %c0_180, %c0_181] : memref<1x5x16x128xf32, #tpu.memory_space<vmem>>, vector<1x1x8x128xf32>
    %169 = vector.shape_cast %168 : vector<1x1x8x128xf32> to vector<8x128xf32>
    %c0_182 = arith.constant 0 : index
    %c0_183 = arith.constant 0 : index
    %c0_184 = arith.constant 0 : index
    %170 = vector.load %arg4[%c0_182, %c0_183, %c0_184] : memref<16x8x128xf32, #tpu.memory_space<vmem>>, vector<1x8x128xf32>
    %171 = vector.shape_cast %170 : vector<1x8x128xf32> to vector<8x128xf32>
    %c0_185 = arith.constant 0 : index
    %172 = memref.load %arg2[%c0_185] : memref<27xf32, #tpu.memory_space<smem>>
    %173 = vector.broadcast %172 : f32 to vector<8x128xf32>
    %174 = arith.mulf %173, %171 : vector<8x128xf32>
    %c9_186 = arith.constant 9 : index
    %175 = memref.load %arg2[%c9_186] : memref<27xf32, #tpu.memory_space<smem>>
    %176 = vector.broadcast %175 : f32 to vector<8x128xf32>
    %177 = arith.mulf %176, %171 : vector<8x128xf32>
    %c18 = arith.constant 18 : index
    %178 = memref.load %arg2[%c18] : memref<27xf32, #tpu.memory_space<smem>>
    %179 = vector.broadcast %178 : f32 to vector<8x128xf32>
    %180 = arith.mulf %179, %171 : vector<8x128xf32>
    %c1_187 = arith.constant 1 : index
    %c0_188 = arith.constant 0 : index
    %c0_189 = arith.constant 0 : index
    %181 = vector.load %arg4[%c1_187, %c0_188, %c0_189] : memref<16x8x128xf32, #tpu.memory_space<vmem>>, vector<1x8x128xf32>
    %182 = vector.shape_cast %181 : vector<1x8x128xf32> to vector<8x128xf32>
    %c1_190 = arith.constant 1 : index
    %183 = memref.load %arg2[%c1_190] : memref<27xf32, #tpu.memory_space<smem>>
    %184 = vector.broadcast %183 : f32 to vector<8x128xf32>
    %185 = arith.mulf %184, %182 : vector<8x128xf32>
    %186 = arith.addf %174, %185 : vector<8x128xf32>
    %c10_191 = arith.constant 10 : index
    %187 = memref.load %arg2[%c10_191] : memref<27xf32, #tpu.memory_space<smem>>
    %188 = vector.broadcast %187 : f32 to vector<8x128xf32>
    %189 = arith.mulf %188, %182 : vector<8x128xf32>
    %190 = arith.addf %177, %189 : vector<8x128xf32>
    %c19 = arith.constant 19 : index
    %191 = memref.load %arg2[%c19] : memref<27xf32, #tpu.memory_space<smem>>
    %192 = vector.broadcast %191 : f32 to vector<8x128xf32>
    %193 = arith.mulf %192, %182 : vector<8x128xf32>
    %194 = arith.addf %180, %193 : vector<8x128xf32>
    %c2_192 = arith.constant 2 : index
    %c0_193 = arith.constant 0 : index
    %c0_194 = arith.constant 0 : index
    %195 = vector.load %arg4[%c2_192, %c0_193, %c0_194] : memref<16x8x128xf32, #tpu.memory_space<vmem>>, vector<1x8x128xf32>
    %196 = vector.shape_cast %195 : vector<1x8x128xf32> to vector<8x128xf32>
    %c2_195 = arith.constant 2 : index
    %197 = memref.load %arg2[%c2_195] : memref<27xf32, #tpu.memory_space<smem>>
    %198 = vector.broadcast %197 : f32 to vector<8x128xf32>
    %199 = arith.mulf %198, %196 : vector<8x128xf32>
    %200 = arith.addf %186, %199 : vector<8x128xf32>
    %c11_196 = arith.constant 11 : index
    %201 = memref.load %arg2[%c11_196] : memref<27xf32, #tpu.memory_space<smem>>
    %202 = vector.broadcast %201 : f32 to vector<8x128xf32>
    %203 = arith.mulf %202, %196 : vector<8x128xf32>
    %204 = arith.addf %190, %203 : vector<8x128xf32>
    %c20 = arith.constant 20 : index
    %205 = memref.load %arg2[%c20] : memref<27xf32, #tpu.memory_space<smem>>
    %206 = vector.broadcast %205 : f32 to vector<8x128xf32>
    %207 = arith.mulf %206, %196 : vector<8x128xf32>
    %208 = arith.addf %194, %207 : vector<8x128xf32>
    %c4_197 = arith.constant 4 : index
    %c0_198 = arith.constant 0 : index
    %c0_199 = arith.constant 0 : index
    %209 = vector.load %arg4[%c4_197, %c0_198, %c0_199] : memref<16x8x128xf32, #tpu.memory_space<vmem>>, vector<1x8x128xf32>
    %210 = vector.shape_cast %209 : vector<1x8x128xf32> to vector<8x128xf32>
    %c3_200 = arith.constant 3 : index
    %211 = memref.load %arg2[%c3_200] : memref<27xf32, #tpu.memory_space<smem>>
    %212 = vector.broadcast %211 : f32 to vector<8x128xf32>
    %213 = arith.mulf %212, %210 : vector<8x128xf32>
    %214 = arith.addf %200, %213 : vector<8x128xf32>
    %c12_201 = arith.constant 12 : index
    %215 = memref.load %arg2[%c12_201] : memref<27xf32, #tpu.memory_space<smem>>
    %216 = vector.broadcast %215 : f32 to vector<8x128xf32>
    %217 = arith.mulf %216, %210 : vector<8x128xf32>
    %218 = arith.addf %204, %217 : vector<8x128xf32>
    %c21 = arith.constant 21 : index
    %219 = memref.load %arg2[%c21] : memref<27xf32, #tpu.memory_space<smem>>
    %220 = vector.broadcast %219 : f32 to vector<8x128xf32>
    %221 = arith.mulf %220, %210 : vector<8x128xf32>
    %222 = arith.addf %208, %221 : vector<8x128xf32>
    %c5_202 = arith.constant 5 : index
    %c0_203 = arith.constant 0 : index
    %c0_204 = arith.constant 0 : index
    %223 = vector.load %arg4[%c5_202, %c0_203, %c0_204] : memref<16x8x128xf32, #tpu.memory_space<vmem>>, vector<1x8x128xf32>
    %224 = vector.shape_cast %223 : vector<1x8x128xf32> to vector<8x128xf32>
    %c4_205 = arith.constant 4 : index
    %225 = memref.load %arg2[%c4_205] : memref<27xf32, #tpu.memory_space<smem>>
    %226 = vector.broadcast %225 : f32 to vector<8x128xf32>
    %227 = arith.mulf %226, %224 : vector<8x128xf32>
    %228 = arith.addf %214, %227 : vector<8x128xf32>
    %c13_206 = arith.constant 13 : index
    %229 = memref.load %arg2[%c13_206] : memref<27xf32, #tpu.memory_space<smem>>
    %230 = vector.broadcast %229 : f32 to vector<8x128xf32>
    %231 = arith.mulf %230, %224 : vector<8x128xf32>
    %232 = arith.addf %218, %231 : vector<8x128xf32>
    %c22 = arith.constant 22 : index
    %233 = memref.load %arg2[%c22] : memref<27xf32, #tpu.memory_space<smem>>
    %234 = vector.broadcast %233 : f32 to vector<8x128xf32>
    %235 = arith.mulf %234, %224 : vector<8x128xf32>
    %236 = arith.addf %222, %235 : vector<8x128xf32>
    %c6_207 = arith.constant 6 : index
    %c0_208 = arith.constant 0 : index
    %c0_209 = arith.constant 0 : index
    %237 = vector.load %arg4[%c6_207, %c0_208, %c0_209] : memref<16x8x128xf32, #tpu.memory_space<vmem>>, vector<1x8x128xf32>
    %238 = vector.shape_cast %237 : vector<1x8x128xf32> to vector<8x128xf32>
    %c5_210 = arith.constant 5 : index
    %239 = memref.load %arg2[%c5_210] : memref<27xf32, #tpu.memory_space<smem>>
    %240 = vector.broadcast %239 : f32 to vector<8x128xf32>
    %241 = arith.mulf %240, %238 : vector<8x128xf32>
    %242 = arith.addf %228, %241 : vector<8x128xf32>
    %c14_211 = arith.constant 14 : index
    %243 = memref.load %arg2[%c14_211] : memref<27xf32, #tpu.memory_space<smem>>
    %244 = vector.broadcast %243 : f32 to vector<8x128xf32>
    %245 = arith.mulf %244, %238 : vector<8x128xf32>
    %246 = arith.addf %232, %245 : vector<8x128xf32>
    %c23 = arith.constant 23 : index
    %247 = memref.load %arg2[%c23] : memref<27xf32, #tpu.memory_space<smem>>
    %248 = vector.broadcast %247 : f32 to vector<8x128xf32>
    %249 = arith.mulf %248, %238 : vector<8x128xf32>
    %250 = arith.addf %236, %249 : vector<8x128xf32>
    %c8_212 = arith.constant 8 : index
    %c0_213 = arith.constant 0 : index
    %c0_214 = arith.constant 0 : index
    %251 = vector.load %arg4[%c8_212, %c0_213, %c0_214] : memref<16x8x128xf32, #tpu.memory_space<vmem>>, vector<1x8x128xf32>
    %252 = vector.shape_cast %251 : vector<1x8x128xf32> to vector<8x128xf32>
    %c6_215 = arith.constant 6 : index
    %253 = memref.load %arg2[%c6_215] : memref<27xf32, #tpu.memory_space<smem>>
    %254 = vector.broadcast %253 : f32 to vector<8x128xf32>
    %255 = arith.mulf %254, %252 : vector<8x128xf32>
    %256 = arith.addf %242, %255 : vector<8x128xf32>
    %c15_216 = arith.constant 15 : index
    %257 = memref.load %arg2[%c15_216] : memref<27xf32, #tpu.memory_space<smem>>
    %258 = vector.broadcast %257 : f32 to vector<8x128xf32>
    %259 = arith.mulf %258, %252 : vector<8x128xf32>
    %260 = arith.addf %246, %259 : vector<8x128xf32>
    %c24 = arith.constant 24 : index
    %261 = memref.load %arg2[%c24] : memref<27xf32, #tpu.memory_space<smem>>
    %262 = vector.broadcast %261 : f32 to vector<8x128xf32>
    %263 = arith.mulf %262, %252 : vector<8x128xf32>
    %264 = arith.addf %250, %263 : vector<8x128xf32>
    %c9_217 = arith.constant 9 : index
    %c0_218 = arith.constant 0 : index
    %c0_219 = arith.constant 0 : index
    %265 = vector.load %arg4[%c9_217, %c0_218, %c0_219] : memref<16x8x128xf32, #tpu.memory_space<vmem>>, vector<1x8x128xf32>
    %266 = vector.shape_cast %265 : vector<1x8x128xf32> to vector<8x128xf32>
    %c7_220 = arith.constant 7 : index
    %267 = memref.load %arg2[%c7_220] : memref<27xf32, #tpu.memory_space<smem>>
    %268 = vector.broadcast %267 : f32 to vector<8x128xf32>
    %269 = arith.mulf %268, %266 : vector<8x128xf32>
    %270 = arith.addf %256, %269 : vector<8x128xf32>
    %c16 = arith.constant 16 : index
    %271 = memref.load %arg2[%c16] : memref<27xf32, #tpu.memory_space<smem>>
    %272 = vector.broadcast %271 : f32 to vector<8x128xf32>
    %273 = arith.mulf %272, %266 : vector<8x128xf32>
    %274 = arith.addf %260, %273 : vector<8x128xf32>
    %c25 = arith.constant 25 : index
    %275 = memref.load %arg2[%c25] : memref<27xf32, #tpu.memory_space<smem>>
    %276 = vector.broadcast %275 : f32 to vector<8x128xf32>
    %277 = arith.mulf %276, %266 : vector<8x128xf32>
    %278 = arith.addf %264, %277 : vector<8x128xf32>
    %c10_221 = arith.constant 10 : index
    %c0_222 = arith.constant 0 : index
    %c0_223 = arith.constant 0 : index
    %279 = vector.load %arg4[%c10_221, %c0_222, %c0_223] : memref<16x8x128xf32, #tpu.memory_space<vmem>>, vector<1x8x128xf32>
    %280 = vector.shape_cast %279 : vector<1x8x128xf32> to vector<8x128xf32>
    %c8_224 = arith.constant 8 : index
    %281 = memref.load %arg2[%c8_224] : memref<27xf32, #tpu.memory_space<smem>>
    %282 = vector.broadcast %281 : f32 to vector<8x128xf32>
    %283 = arith.mulf %282, %280 : vector<8x128xf32>
    %284 = arith.addf %270, %283 : vector<8x128xf32>
    %c17 = arith.constant 17 : index
    %285 = memref.load %arg2[%c17] : memref<27xf32, #tpu.memory_space<smem>>
    %286 = vector.broadcast %285 : f32 to vector<8x128xf32>
    %287 = arith.mulf %286, %280 : vector<8x128xf32>
    %288 = arith.addf %274, %287 : vector<8x128xf32>
    %c26 = arith.constant 26 : index
    %289 = memref.load %arg2[%c26] : memref<27xf32, #tpu.memory_space<smem>>
    %290 = vector.broadcast %289 : f32 to vector<8x128xf32>
    %291 = arith.mulf %290, %280 : vector<8x128xf32>
    %292 = arith.addf %278, %291 : vector<8x128xf32>
    %293 = arith.mulf %284, %169 : vector<8x128xf32>
    %c0_225 = arith.constant 0 : index
    %c0_226 = arith.constant 0 : index
    %294 = vector.load %arg3[%c0_225, %c0_226] : memref<8x128xf32, #tpu.memory_space<vmem>>, vector<1x128xf32>
    %cst = arith.constant dense<0.000000e+00> : vector<128xf32>
    %295 = vector.multi_reduction <add>, %293, %cst [0] : vector<8x128xf32> to vector<128xf32>
    %296 = vector.shape_cast %295 : vector<128xf32> to vector<1x128xf32>
    %297 = arith.addf %294, %296 : vector<1x128xf32>
    %c0_227 = arith.constant 0 : index
    %c0_228 = arith.constant 0 : index
    %298 = vector.load %arg3[%c0_227, %c0_228] : memref<8x128xf32, #tpu.memory_space<vmem>>, vector<1x128xf32>
    tpu.vector_store %arg3[%c0_227, %c0_228], %297 {strides = array<i32>} : memref<8x128xf32, #tpu.memory_space<vmem>>, vector<1x128xf32>,
    %c3_229 = arith.constant 3 : index
    %c0_230 = arith.constant 0 : index
    %299 = vector.load %arg3[%c3_229, %c0_230] : memref<8x128xf32, #tpu.memory_space<vmem>>, vector<1x128xf32>
    %300 = arith.mulf %293, %284 : vector<8x128xf32>
    %cst_231 = arith.constant dense<0.000000e+00> : vector<128xf32>
    %301 = vector.multi_reduction <add>, %300, %cst_231 [0] : vector<8x128xf32> to vector<128xf32>
    %302 = vector.shape_cast %301 : vector<128xf32> to vector<1x128xf32>
    %303 = arith.addf %299, %302 : vector<1x128xf32>
    %c3_232 = arith.constant 3 : index
    %c0_233 = arith.constant 0 : index
    %304 = vector.load %arg3[%c3_232, %c0_233] : memref<8x128xf32, #tpu.memory_space<vmem>>, vector<1x128xf32>
    tpu.vector_store %arg3[%c3_232, %c0_233], %303 {strides = array<i32>} : memref<8x128xf32, #tpu.memory_space<vmem>>, vector<1x128xf32>,
    %305 = arith.mulf %288, %169 : vector<8x128xf32>
    %c1_234 = arith.constant 1 : index
    %c0_235 = arith.constant 0 : index
    %306 = vector.load %arg3[%c1_234, %c0_235] : memref<8x128xf32, #tpu.memory_space<vmem>>, vector<1x128xf32>
    %cst_236 = arith.constant dense<0.000000e+00> : vector<128xf32>
    %307 = vector.multi_reduction <add>, %305, %cst_236 [0] : vector<8x128xf32> to vector<128xf32>
    %308 = vector.shape_cast %307 : vector<128xf32> to vector<1x128xf32>
    %309 = arith.addf %306, %308 : vector<1x128xf32>
    %c1_237 = arith.constant 1 : index
    %c0_238 = arith.constant 0 : index
    %310 = vector.load %arg3[%c1_237, %c0_238] : memref<8x128xf32, #tpu.memory_space<vmem>>, vector<1x128xf32>
    tpu.vector_store %arg3[%c1_237, %c0_238], %309 {strides = array<i32>} : memref<8x128xf32, #tpu.memory_space<vmem>>, vector<1x128xf32>,
    %c4_239 = arith.constant 4 : index
    %c0_240 = arith.constant 0 : index
    %311 = vector.load %arg3[%c4_239, %c0_240] : memref<8x128xf32, #tpu.memory_space<vmem>>, vector<1x128xf32>
    %312 = arith.mulf %305, %288 : vector<8x128xf32>
    %cst_241 = arith.constant dense<0.000000e+00> : vector<128xf32>
    %313 = vector.multi_reduction <add>, %312, %cst_241 [0] : vector<8x128xf32> to vector<128xf32>
    %314 = vector.shape_cast %313 : vector<128xf32> to vector<1x128xf32>
    %315 = arith.addf %311, %314 : vector<1x128xf32>
    %c4_242 = arith.constant 4 : index
    %c0_243 = arith.constant 0 : index
    %316 = vector.load %arg3[%c4_242, %c0_243] : memref<8x128xf32, #tpu.memory_space<vmem>>, vector<1x128xf32>
    tpu.vector_store %arg3[%c4_242, %c0_243], %315 {strides = array<i32>} : memref<8x128xf32, #tpu.memory_space<vmem>>, vector<1x128xf32>,
    %317 = arith.mulf %292, %169 : vector<8x128xf32>
    %c2_244 = arith.constant 2 : index
    %c0_245 = arith.constant 0 : index
    %318 = vector.load %arg3[%c2_244, %c0_245] : memref<8x128xf32, #tpu.memory_space<vmem>>, vector<1x128xf32>
    %cst_246 = arith.constant dense<0.000000e+00> : vector<128xf32>
    %319 = vector.multi_reduction <add>, %317, %cst_246 [0] : vector<8x128xf32> to vector<128xf32>
    %320 = vector.shape_cast %319 : vector<128xf32> to vector<1x128xf32>
    %321 = arith.addf %318, %320 : vector<1x128xf32>
    %c2_247 = arith.constant 2 : index
    %c0_248 = arith.constant 0 : index
    %322 = vector.load %arg3[%c2_247, %c0_248] : memref<8x128xf32, #tpu.memory_space<vmem>>, vector<1x128xf32>
    tpu.vector_store %arg3[%c2_247, %c0_248], %321 {strides = array<i32>} : memref<8x128xf32, #tpu.memory_space<vmem>>, vector<1x128xf32>,
    %c5_249 = arith.constant 5 : index
    %c0_250 = arith.constant 0 : index
    %323 = vector.load %arg3[%c5_249, %c0_250] : memref<8x128xf32, #tpu.memory_space<vmem>>, vector<1x128xf32>
    %324 = arith.mulf %317, %292 : vector<8x128xf32>
    %cst_251 = arith.constant dense<0.000000e+00> : vector<128xf32>
    %325 = vector.multi_reduction <add>, %324, %cst_251 [0] : vector<8x128xf32> to vector<128xf32>
    %326 = vector.shape_cast %325 : vector<128xf32> to vector<1x128xf32>
    %327 = arith.addf %323, %326 : vector<1x128xf32>
    %c5_252 = arith.constant 5 : index
    %c0_253 = arith.constant 0 : index
    %328 = vector.load %arg3[%c5_252, %c0_253] : memref<8x128xf32, #tpu.memory_space<vmem>>, vector<1x128xf32>
    tpu.vector_store %arg3[%c5_252, %c0_253], %327 {strides = array<i32>} : memref<8x128xf32, #tpu.memory_space<vmem>>, vector<1x128xf32>,
    %c1_254 = arith.constant 1 : index
    %c0_255 = arith.constant 0 : index
    %c0_256 = arith.constant 0 : index
    %329 = vector.load %arg4[%c1_254, %c0_255, %c0_256] : memref<16x8x128xf32, #tpu.memory_space<vmem>>, vector<1x8x128xf32>
    %330 = vector.shape_cast %329 : vector<1x8x128xf32> to vector<8x128xf32>
    %c0_257 = arith.constant 0 : index
    %331 = memref.load %arg2[%c0_257] : memref<27xf32, #tpu.memory_space<smem>>
    %332 = vector.broadcast %331 : f32 to vector<8x128xf32>
    %333 = arith.mulf %332, %330 : vector<8x128xf32>
    %c9_258 = arith.constant 9 : index
    %334 = memref.load %arg2[%c9_258] : memref<27xf32, #tpu.memory_space<smem>>
    %335 = vector.broadcast %334 : f32 to vector<8x128xf32>
    %336 = arith.mulf %335, %330 : vector<8x128xf32>
    %c18_259 = arith.constant 18 : index
    %337 = memref.load %arg2[%c18_259] : memref<27xf32, #tpu.memory_space<smem>>
    %338 = vector.broadcast %337 : f32 to vector<8x128xf32>
    %339 = arith.mulf %338, %330 : vector<8x128xf32>
    %c2_260 = arith.constant 2 : index
    %c0_261 = arith.constant 0 : index
    %c0_262 = arith.constant 0 : index
    %340 = vector.load %arg4[%c2_260, %c0_261, %c0_262] : memref<16x8x128xf32, #tpu.memory_space<vmem>>, vector<1x8x128xf32>
    %341 = vector.shape_cast %340 : vector<1x8x128xf32> to vector<8x128xf32>
    %c1_263 = arith.constant 1 : index
    %342 = memref.load %arg2[%c1_263] : memref<27xf32, #tpu.memory_space<smem>>
    %343 = vector.broadcast %342 : f32 to vector<8x128xf32>
    %344 = arith.mulf %343, %341 : vector<8x128xf32>
    %345 = arith.addf %333, %344 : vector<8x128xf32>
    %c10_264 = arith.constant 10 : index
    %346 = memref.load %arg2[%c10_264] : memref<27xf32, #tpu.memory_space<smem>>
    %347 = vector.broadcast %346 : f32 to vector<8x128xf32>
    %348 = arith.mulf %347, %341 : vector<8x128xf32>
    %349 = arith.addf %336, %348 : vector<8x128xf32>
    %c19_265 = arith.constant 19 : index
    %350 = memref.load %arg2[%c19_265] : memref<27xf32, #tpu.memory_space<smem>>
    %351 = vector.broadcast %350 : f32 to vector<8x128xf32>
    %352 = arith.mulf %351, %341 : vector<8x128xf32>
    %353 = arith.addf %339, %352 : vector<8x128xf32>
    %c3_266 = arith.constant 3 : index
    %c0_267 = arith.constant 0 : index
    %c0_268 = arith.constant 0 : index
    %354 = vector.load %arg4[%c3_266, %c0_267, %c0_268] : memref<16x8x128xf32, #tpu.memory_space<vmem>>, vector<1x8x128xf32>
    %355 = vector.shape_cast %354 : vector<1x8x128xf32> to vector<8x128xf32>
    %c2_269 = arith.constant 2 : index
    %356 = memref.load %arg2[%c2_269] : memref<27xf32, #tpu.memory_space<smem>>
    %357 = vector.broadcast %356 : f32 to vector<8x128xf32>
    %358 = arith.mulf %357, %355 : vector<8x128xf32>
    %359 = arith.addf %345, %358 : vector<8x128xf32>
    %c11_270 = arith.constant 11 : index
    %360 = memref.load %arg2[%c11_270] : memref<27xf32, #tpu.memory_space<smem>>
    %361 = vector.broadcast %360 : f32 to vector<8x128xf32>
    %362 = arith.mulf %361, %355 : vector<8x128xf32>
    %363 = arith.addf %349, %362 : vector<8x128xf32>
    %c20_271 = arith.constant 20 : index
    %364 = memref.load %arg2[%c20_271] : memref<27xf32, #tpu.memory_space<smem>>
    %365 = vector.broadcast %364 : f32 to vector<8x128xf32>
    %366 = arith.mulf %365, %355 : vector<8x128xf32>
    %367 = arith.addf %353, %366 : vector<8x128xf32>
    %c5_272 = arith.constant 5 : index
    %c0_273 = arith.constant 0 : index
    %c0_274 = arith.constant 0 : index
    %368 = vector.load %arg4[%c5_272, %c0_273, %c0_274] : memref<16x8x128xf32, #tpu.memory_space<vmem>>, vector<1x8x128xf32>
    %369 = vector.shape_cast %368 : vector<1x8x128xf32> to vector<8x128xf32>
    %c3_275 = arith.constant 3 : index
    %370 = memref.load %arg2[%c3_275] : memref<27xf32, #tpu.memory_space<smem>>
    %371 = vector.broadcast %370 : f32 to vector<8x128xf32>
    %372 = arith.mulf %371, %369 : vector<8x128xf32>
    %373 = arith.addf %359, %372 : vector<8x128xf32>
    %c12_276 = arith.constant 12 : index
    %374 = memref.load %arg2[%c12_276] : memref<27xf32, #tpu.memory_space<smem>>
    %375 = vector.broadcast %374 : f32 to vector<8x128xf32>
    %376 = arith.mulf %375, %369 : vector<8x128xf32>
    %377 = arith.addf %363, %376 : vector<8x128xf32>
    %c21_277 = arith.constant 21 : index
    %378 = memref.load %arg2[%c21_277] : memref<27xf32, #tpu.memory_space<smem>>
    %379 = vector.broadcast %378 : f32 to vector<8x128xf32>
    %380 = arith.mulf %379, %369 : vector<8x128xf32>
    %381 = arith.addf %367, %380 : vector<8x128xf32>
    %c6_278 = arith.constant 6 : index
    %c0_279 = arith.constant 0 : index
    %c0_280 = arith.constant 0 : index
    %382 = vector.load %arg4[%c6_278, %c0_279, %c0_280] : memref<16x8x128xf32, #tpu.memory_space<vmem>>, vector<1x8x128xf32>
    %383 = vector.shape_cast %382 : vector<1x8x128xf32> to vector<8x128xf32>
    %c4_281 = arith.constant 4 : index
    %384 = memref.load %arg2[%c4_281] : memref<27xf32, #tpu.memory_space<smem>>
    %385 = vector.broadcast %384 : f32 to vector<8x128xf32>
    %386 = arith.mulf %385, %383 : vector<8x128xf32>
    %387 = arith.addf %373, %386 : vector<8x128xf32>
    %c13_282 = arith.constant 13 : index
    %388 = memref.load %arg2[%c13_282] : memref<27xf32, #tpu.memory_space<smem>>
    %389 = vector.broadcast %388 : f32 to vector<8x128xf32>
    %390 = arith.mulf %389, %383 : vector<8x128xf32>
    %391 = arith.addf %377, %390 : vector<8x128xf32>
    %c22_283 = arith.constant 22 : index
    %392 = memref.load %arg2[%c22_283] : memref<27xf32, #tpu.memory_space<smem>>
    %393 = vector.broadcast %392 : f32 to vector<8x128xf32>
    %394 = arith.mulf %393, %383 : vector<8x128xf32>
    %395 = arith.addf %381, %394 : vector<8x128xf32>
    %c7_284 = arith.constant 7 : index
    %c0_285 = arith.constant 0 : index
    %c0_286 = arith.constant 0 : index
    %396 = vector.load %arg4[%c7_284, %c0_285, %c0_286] : memref<16x8x128xf32, #tpu.memory_space<vmem>>, vector<1x8x128xf32>
    %397 = vector.shape_cast %396 : vector<1x8x128xf32> to vector<8x128xf32>
    %c5_287 = arith.constant 5 : index
    %398 = memref.load %arg2[%c5_287] : memref<27xf32, #tpu.memory_space<smem>>
    %399 = vector.broadcast %398 : f32 to vector<8x128xf32>
    %400 = arith.mulf %399, %397 : vector<8x128xf32>
    %401 = arith.addf %387, %400 : vector<8x128xf32>
    %c14_288 = arith.constant 14 : index
    %402 = memref.load %arg2[%c14_288] : memref<27xf32, #tpu.memory_space<smem>>
    %403 = vector.broadcast %402 : f32 to vector<8x128xf32>
    %404 = arith.mulf %403, %397 : vector<8x128xf32>
    %405 = arith.addf %391, %404 : vector<8x128xf32>
    %c23_289 = arith.constant 23 : index
    %406 = memref.load %arg2[%c23_289] : memref<27xf32, #tpu.memory_space<smem>>
    %407 = vector.broadcast %406 : f32 to vector<8x128xf32>
    %408 = arith.mulf %407, %397 : vector<8x128xf32>
    %409 = arith.addf %395, %408 : vector<8x128xf32>
    %c9_290 = arith.constant 9 : index
    %c0_291 = arith.constant 0 : index
    %c0_292 = arith.constant 0 : index
    %410 = vector.load %arg4[%c9_290, %c0_291, %c0_292] : memref<16x8x128xf32, #tpu.memory_space<vmem>>, vector<1x8x128xf32>
    %411 = vector.shape_cast %410 : vector<1x8x128xf32> to vector<8x128xf32>
    %c6_293 = arith.constant 6 : index
    %412 = memref.load %arg2[%c6_293] : memref<27xf32, #tpu.memory_space<smem>>
    %413 = vector.broadcast %412 : f32 to vector<8x128xf32>
    %414 = arith.mulf %413, %411 : vector<8x128xf32>
    %415 = arith.addf %401, %414 : vector<8x128xf32>
    %c15_294 = arith.constant 15 : index
    %416 = memref.load %arg2[%c15_294] : memref<27xf32, #tpu.memory_space<smem>>
    %417 = vector.broadcast %416 : f32 to vector<8x128xf32>
    %418 = arith.mulf %417, %411 : vector<8x128xf32>
    %419 = arith.addf %405, %418 : vector<8x128xf32>
    %c24_295 = arith.constant 24 : index
    %420 = memref.load %arg2[%c24_295] : memref<27xf32, #tpu.memory_space<smem>>
    %421 = vector.broadcast %420 : f32 to vector<8x128xf32>
    %422 = arith.mulf %421, %411 : vector<8x128xf32>
    %423 = arith.addf %409, %422 : vector<8x128xf32>
    %c10_296 = arith.constant 10 : index
    %c0_297 = arith.constant 0 : index
    %c0_298 = arith.constant 0 : index
    %424 = vector.load %arg4[%c10_296, %c0_297, %c0_298] : memref<16x8x128xf32, #tpu.memory_space<vmem>>, vector<1x8x128xf32>
    %425 = vector.shape_cast %424 : vector<1x8x128xf32> to vector<8x128xf32>
    %c7_299 = arith.constant 7 : index
    %426 = memref.load %arg2[%c7_299] : memref<27xf32, #tpu.memory_space<smem>>
    %427 = vector.broadcast %426 : f32 to vector<8x128xf32>
    %428 = arith.mulf %427, %425 : vector<8x128xf32>
    %429 = arith.addf %415, %428 : vector<8x128xf32>
    %c16_300 = arith.constant 16 : index
    %430 = memref.load %arg2[%c16_300] : memref<27xf32, #tpu.memory_space<smem>>
    %431 = vector.broadcast %430 : f32 to vector<8x128xf32>
    %432 = arith.mulf %431, %425 : vector<8x128xf32>
    %433 = arith.addf %419, %432 : vector<8x128xf32>
    %c25_301 = arith.constant 25 : index
    %434 = memref.load %arg2[%c25_301] : memref<27xf32, #tpu.memory_space<smem>>
    %435 = vector.broadcast %434 : f32 to vector<8x128xf32>
    %436 = arith.mulf %435, %425 : vector<8x128xf32>
    %437 = arith.addf %423, %436 : vector<8x128xf32>
    %c11_302 = arith.constant 11 : index
    %c0_303 = arith.constant 0 : index
    %c0_304 = arith.constant 0 : index
    %438 = vector.load %arg4[%c11_302, %c0_303, %c0_304] : memref<16x8x128xf32, #tpu.memory_space<vmem>>, vector<1x8x128xf32>
    %439 = vector.shape_cast %438 : vector<1x8x128xf32> to vector<8x128xf32>
    %c8_305 = arith.constant 8 : index
    %440 = memref.load %arg2[%c8_305] : memref<27xf32, #tpu.memory_space<smem>>
    %441 = vector.broadcast %440 : f32 to vector<8x128xf32>
    %442 = arith.mulf %441, %439 : vector<8x128xf32>
    %443 = arith.addf %429, %442 : vector<8x128xf32>
    %c17_306 = arith.constant 17 : index
    %444 = memref.load %arg2[%c17_306] : memref<27xf32, #tpu.memory_space<smem>>
    %445 = vector.broadcast %444 : f32 to vector<8x128xf32>
    %446 = arith.mulf %445, %439 : vector<8x128xf32>
    %447 = arith.addf %433, %446 : vector<8x128xf32>
    %c26_307 = arith.constant 26 : index
    %448 = memref.load %arg2[%c26_307] : memref<27xf32, #tpu.memory_space<smem>>
    %449 = vector.broadcast %448 : f32 to vector<8x128xf32>
    %450 = arith.mulf %449, %439 : vector<8x128xf32>
    %451 = arith.addf %437, %450 : vector<8x128xf32>
    %452 = arith.mulf %443, %169 : vector<8x128xf32>
    %c0_308 = arith.constant 0 : index
    %c0_309 = arith.constant 0 : index
    %453 = vector.load %arg3[%c0_308, %c0_309] : memref<8x128xf32, #tpu.memory_space<vmem>>, vector<1x128xf32>
    %cst_310 = arith.constant dense<0.000000e+00> : vector<128xf32>
    %454 = vector.multi_reduction <add>, %452, %cst_310 [0] : vector<8x128xf32> to vector<128xf32>
    %455 = vector.shape_cast %454 : vector<128xf32> to vector<1x128xf32>
    %456 = arith.addf %453, %455 : vector<1x128xf32>
    %c0_311 = arith.constant 0 : index
    %c0_312 = arith.constant 0 : index
    %457 = vector.load %arg3[%c0_311, %c0_312] : memref<8x128xf32, #tpu.memory_space<vmem>>, vector<1x128xf32>
    tpu.vector_store %arg3[%c0_311, %c0_312], %456 {strides = array<i32>} : memref<8x128xf32, #tpu.memory_space<vmem>>, vector<1x128xf32>,
    %c3_313 = arith.constant 3 : index
    %c0_314 = arith.constant 0 : index
    %458 = vector.load %arg3[%c3_313, %c0_314] : memref<8x128xf32, #tpu.memory_space<vmem>>, vector<1x128xf32>
    %459 = arith.mulf %452, %443 : vector<8x128xf32>
    %cst_315 = arith.constant dense<0.000000e+00> : vector<128xf32>
    %460 = vector.multi_reduction <add>, %459, %cst_315 [0] : vector<8x128xf32> to vector<128xf32>
    %461 = vector.shape_cast %460 : vector<128xf32> to vector<1x128xf32>
    %462 = arith.addf %458, %461 : vector<1x128xf32>
    %c3_316 = arith.constant 3 : index
    %c0_317 = arith.constant 0 : index
    %463 = vector.load %arg3[%c3_316, %c0_317] : memref<8x128xf32, #tpu.memory_space<vmem>>, vector<1x128xf32>
    tpu.vector_store %arg3[%c3_316, %c0_317], %462 {strides = array<i32>} : memref<8x128xf32, #tpu.memory_space<vmem>>, vector<1x128xf32>,
    %464 = arith.mulf %447, %169 : vector<8x128xf32>
    %c1_318 = arith.constant 1 : index
    %c0_319 = arith.constant 0 : index
    %465 = vector.load %arg3[%c1_318, %c0_319] : memref<8x128xf32, #tpu.memory_space<vmem>>, vector<1x128xf32>
    %cst_320 = arith.constant dense<0.000000e+00> : vector<128xf32>
    %466 = vector.multi_reduction <add>, %464, %cst_320 [0] : vector<8x128xf32> to vector<128xf32>
    %467 = vector.shape_cast %466 : vector<128xf32> to vector<1x128xf32>
    %468 = arith.addf %465, %467 : vector<1x128xf32>
    %c1_321 = arith.constant 1 : index
    %c0_322 = arith.constant 0 : index
    %469 = vector.load %arg3[%c1_321, %c0_322] : memref<8x128xf32, #tpu.memory_space<vmem>>, vector<1x128xf32>
    tpu.vector_store %arg3[%c1_321, %c0_322], %468 {strides = array<i32>} : memref<8x128xf32, #tpu.memory_space<vmem>>, vector<1x128xf32>,
    %c4_323 = arith.constant 4 : index
    %c0_324 = arith.constant 0 : index
    %470 = vector.load %arg3[%c4_323, %c0_324] : memref<8x128xf32, #tpu.memory_space<vmem>>, vector<1x128xf32>
    %471 = arith.mulf %464, %447 : vector<8x128xf32>
    %cst_325 = arith.constant dense<0.000000e+00> : vector<128xf32>
    %472 = vector.multi_reduction <add>, %471, %cst_325 [0] : vector<8x128xf32> to vector<128xf32>
    %473 = vector.shape_cast %472 : vector<128xf32> to vector<1x128xf32>
    %474 = arith.addf %470, %473 : vector<1x128xf32>
    %c4_326 = arith.constant 4 : index
    %c0_327 = arith.constant 0 : index
    %475 = vector.load %arg3[%c4_326, %c0_327] : memref<8x128xf32, #tpu.memory_space<vmem>>, vector<1x128xf32>
    tpu.vector_store %arg3[%c4_326, %c0_327], %474 {strides = array<i32>} : memref<8x128xf32, #tpu.memory_space<vmem>>, vector<1x128xf32>,
    %476 = arith.mulf %451, %169 : vector<8x128xf32>
    %c2_328 = arith.constant 2 : index
    %c0_329 = arith.constant 0 : index
    %477 = vector.load %arg3[%c2_328, %c0_329] : memref<8x128xf32, #tpu.memory_space<vmem>>, vector<1x128xf32>
    %cst_330 = arith.constant dense<0.000000e+00> : vector<128xf32>
    %478 = vector.multi_reduction <add>, %476, %cst_330 [0] : vector<8x128xf32> to vector<128xf32>
    %479 = vector.shape_cast %478 : vector<128xf32> to vector<1x128xf32>
    %480 = arith.addf %477, %479 : vector<1x128xf32>
    %c2_331 = arith.constant 2 : index
    %c0_332 = arith.constant 0 : index
    %481 = vector.load %arg3[%c2_331, %c0_332] : memref<8x128xf32, #tpu.memory_space<vmem>>, vector<1x128xf32>
    tpu.vector_store %arg3[%c2_331, %c0_332], %480 {strides = array<i32>} : memref<8x128xf32, #tpu.memory_space<vmem>>, vector<1x128xf32>,
    %c5_333 = arith.constant 5 : index
    %c0_334 = arith.constant 0 : index
    %482 = vector.load %arg3[%c5_333, %c0_334] : memref<8x128xf32, #tpu.memory_space<vmem>>, vector<1x128xf32>
    %483 = arith.mulf %476, %451 : vector<8x128xf32>
    %cst_335 = arith.constant dense<0.000000e+00> : vector<128xf32>
    %484 = vector.multi_reduction <add>, %483, %cst_335 [0] : vector<8x128xf32> to vector<128xf32>
    %485 = vector.shape_cast %484 : vector<128xf32> to vector<1x128xf32>
    %486 = arith.addf %482, %485 : vector<1x128xf32>
    %c5_336 = arith.constant 5 : index
    %c0_337 = arith.constant 0 : index
    %487 = vector.load %arg3[%c5_336, %c0_337] : memref<8x128xf32, #tpu.memory_space<vmem>>, vector<1x128xf32>
    tpu.vector_store %arg3[%c5_336, %c0_337], %486 {strides = array<i32>} : memref<8x128xf32, #tpu.memory_space<vmem>>, vector<1x128xf32>,
    %c4_338 = arith.constant 4 : index
    %c0_339 = arith.constant 0 : index
    %c0_340 = arith.constant 0 : index
    %488 = vector.load %arg4[%c4_338, %c0_339, %c0_340] : memref<16x8x128xf32, #tpu.memory_space<vmem>>, vector<1x8x128xf32>
    %489 = vector.shape_cast %488 : vector<1x8x128xf32> to vector<8x128xf32>
    %c0_341 = arith.constant 0 : index
    %490 = memref.load %arg2[%c0_341] : memref<27xf32, #tpu.memory_space<smem>>
    %491 = vector.broadcast %490 : f32 to vector<8x128xf32>
    %492 = arith.mulf %491, %489 : vector<8x128xf32>
    %c9_342 = arith.constant 9 : index
    %493 = memref.load %arg2[%c9_342] : memref<27xf32, #tpu.memory_space<smem>>
    %494 = vector.broadcast %493 : f32 to vector<8x128xf32>
    %495 = arith.mulf %494, %489 : vector<8x128xf32>
    %c18_343 = arith.constant 18 : index
    %496 = memref.load %arg2[%c18_343] : memref<27xf32, #tpu.memory_space<smem>>
    %497 = vector.broadcast %496 : f32 to vector<8x128xf32>
    %498 = arith.mulf %497, %489 : vector<8x128xf32>
    %c5_344 = arith.constant 5 : index
    %c0_345 = arith.constant 0 : index
    %c0_346 = arith.constant 0 : index
    %499 = vector.load %arg4[%c5_344, %c0_345, %c0_346] : memref<16x8x128xf32, #tpu.memory_space<vmem>>, vector<1x8x128xf32>
    %500 = vector.shape_cast %499 : vector<1x8x128xf32> to vector<8x128xf32>
    %c1_347 = arith.constant 1 : index
    %501 = memref.load %arg2[%c1_347] : memref<27xf32, #tpu.memory_space<smem>>
    %502 = vector.broadcast %501 : f32 to vector<8x128xf32>
    %503 = arith.mulf %502, %500 : vector<8x128xf32>
    %504 = arith.addf %492, %503 : vector<8x128xf32>
    %c10_348 = arith.constant 10 : index
    %505 = memref.load %arg2[%c10_348] : memref<27xf32, #tpu.memory_space<smem>>
    %506 = vector.broadcast %505 : f32 to vector<8x128xf32>
    %507 = arith.mulf %506, %500 : vector<8x128xf32>
    %508 = arith.addf %495, %507 : vector<8x128xf32>
    %c19_349 = arith.constant 19 : index
    %509 = memref.load %arg2[%c19_349] : memref<27xf32, #tpu.memory_space<smem>>
    %510 = vector.broadcast %509 : f32 to vector<8x128xf32>
    %511 = arith.mulf %510, %500 : vector<8x128xf32>
    %512 = arith.addf %498, %511 : vector<8x128xf32>
    %c6_350 = arith.constant 6 : index
    %c0_351 = arith.constant 0 : index
    %c0_352 = arith.constant 0 : index
    %513 = vector.load %arg4[%c6_350, %c0_351, %c0_352] : memref<16x8x128xf32, #tpu.memory_space<vmem>>, vector<1x8x128xf32>
    %514 = vector.shape_cast %513 : vector<1x8x128xf32> to vector<8x128xf32>
    %c2_353 = arith.constant 2 : index
    %515 = memref.load %arg2[%c2_353] : memref<27xf32, #tpu.memory_space<smem>>
    %516 = vector.broadcast %515 : f32 to vector<8x128xf32>
    %517 = arith.mulf %516, %514 : vector<8x128xf32>
    %518 = arith.addf %504, %517 : vector<8x128xf32>
    %c11_354 = arith.constant 11 : index
    %519 = memref.load %arg2[%c11_354] : memref<27xf32, #tpu.memory_space<smem>>
    %520 = vector.broadcast %519 : f32 to vector<8x128xf32>
    %521 = arith.mulf %520, %514 : vector<8x128xf32>
    %522 = arith.addf %508, %521 : vector<8x128xf32>
    %c20_355 = arith.constant 20 : index
    %523 = memref.load %arg2[%c20_355] : memref<27xf32, #tpu.memory_space<smem>>
    %524 = vector.broadcast %523 : f32 to vector<8x128xf32>
    %525 = arith.mulf %524, %514 : vector<8x128xf32>
    %526 = arith.addf %512, %525 : vector<8x128xf32>
    %c8_356 = arith.constant 8 : index
    %c0_357 = arith.constant 0 : index
    %c0_358 = arith.constant 0 : index
    %527 = vector.load %arg4[%c8_356, %c0_357, %c0_358] : memref<16x8x128xf32, #tpu.memory_space<vmem>>, vector<1x8x128xf32>
    %528 = vector.shape_cast %527 : vector<1x8x128xf32> to vector<8x128xf32>
    %c3_359 = arith.constant 3 : index
    %529 = memref.load %arg2[%c3_359] : memref<27xf32, #tpu.memory_space<smem>>
    %530 = vector.broadcast %529 : f32 to vector<8x128xf32>
    %531 = arith.mulf %530, %528 : vector<8x128xf32>
    %532 = arith.addf %518, %531 : vector<8x128xf32>
    %c12_360 = arith.constant 12 : index
    %533 = memref.load %arg2[%c12_360] : memref<27xf32, #tpu.memory_space<smem>>
    %534 = vector.broadcast %533 : f32 to vector<8x128xf32>
    %535 = arith.mulf %534, %528 : vector<8x128xf32>
    %536 = arith.addf %522, %535 : vector<8x128xf32>
    %c21_361 = arith.constant 21 : index
    %537 = memref.load %arg2[%c21_361] : memref<27xf32, #tpu.memory_space<smem>>
    %538 = vector.broadcast %537 : f32 to vector<8x128xf32>
    %539 = arith.mulf %538, %528 : vector<8x128xf32>
    %540 = arith.addf %526, %539 : vector<8x128xf32>
    %c9_362 = arith.constant 9 : index
    %c0_363 = arith.constant 0 : index
    %c0_364 = arith.constant 0 : index
    %541 = vector.load %arg4[%c9_362, %c0_363, %c0_364] : memref<16x8x128xf32, #tpu.memory_space<vmem>>, vector<1x8x128xf32>
    %542 = vector.shape_cast %541 : vector<1x8x128xf32> to vector<8x128xf32>
    %c4_365 = arith.constant 4 : index
    %543 = memref.load %arg2[%c4_365] : memref<27xf32, #tpu.memory_space<smem>>
    %544 = vector.broadcast %543 : f32 to vector<8x128xf32>
    %545 = arith.mulf %544, %542 : vector<8x128xf32>
    %546 = arith.addf %532, %545 : vector<8x128xf32>
    %c13_366 = arith.constant 13 : index
    %547 = memref.load %arg2[%c13_366] : memref<27xf32, #tpu.memory_space<smem>>
    %548 = vector.broadcast %547 : f32 to vector<8x128xf32>
    %549 = arith.mulf %548, %542 : vector<8x128xf32>
    %550 = arith.addf %536, %549 : vector<8x128xf32>
    %c22_367 = arith.constant 22 : index
    %551 = memref.load %arg2[%c22_367] : memref<27xf32, #tpu.memory_space<smem>>
    %552 = vector.broadcast %551 : f32 to vector<8x128xf32>
    %553 = arith.mulf %552, %542 : vector<8x128xf32>
    %554 = arith.addf %540, %553 : vector<8x128xf32>
    %c10_368 = arith.constant 10 : index
    %c0_369 = arith.constant 0 : index
    %c0_370 = arith.constant 0 : index
    %555 = vector.load %arg4[%c10_368, %c0_369, %c0_370] : memref<16x8x128xf32, #tpu.memory_space<vmem>>, vector<1x8x128xf32>
    %556 = vector.shape_cast %555 : vector<1x8x128xf32> to vector<8x128xf32>
    %c5_371 = arith.constant 5 : index
    %557 = memref.load %arg2[%c5_371] : memref<27xf32, #tpu.memory_space<smem>>
    %558 = vector.broadcast %557 : f32 to vector<8x128xf32>
    %559 = arith.mulf %558, %556 : vector<8x128xf32>
    %560 = arith.addf %546, %559 : vector<8x128xf32>
    %c14_372 = arith.constant 14 : index
    %561 = memref.load %arg2[%c14_372] : memref<27xf32, #tpu.memory_space<smem>>
    %562 = vector.broadcast %561 : f32 to vector<8x128xf32>
    %563 = arith.mulf %562, %556 : vector<8x128xf32>
    %564 = arith.addf %550, %563 : vector<8x128xf32>
    %c23_373 = arith.constant 23 : index
    %565 = memref.load %arg2[%c23_373] : memref<27xf32, #tpu.memory_space<smem>>
    %566 = vector.broadcast %565 : f32 to vector<8x128xf32>
    %567 = arith.mulf %566, %556 : vector<8x128xf32>
    %568 = arith.addf %554, %567 : vector<8x128xf32>
    %c12_374 = arith.constant 12 : index
    %c0_375 = arith.constant 0 : index
    %c0_376 = arith.constant 0 : index
    %569 = vector.load %arg4[%c12_374, %c0_375, %c0_376] : memref<16x8x128xf32, #tpu.memory_space<vmem>>, vector<1x8x128xf32>
    %570 = vector.shape_cast %569 : vector<1x8x128xf32> to vector<8x128xf32>
    %c6_377 = arith.constant 6 : index
    %571 = memref.load %arg2[%c6_377] : memref<27xf32, #tpu.memory_space<smem>>
    %572 = vector.broadcast %571 : f32 to vector<8x128xf32>
    %573 = arith.mulf %572, %570 : vector<8x128xf32>
    %574 = arith.addf %560, %573 : vector<8x128xf32>
    %c15_378 = arith.constant 15 : index
    %575 = memref.load %arg2[%c15_378] : memref<27xf32, #tpu.memory_space<smem>>
    %576 = vector.broadcast %575 : f32 to vector<8x128xf32>
    %577 = arith.mulf %576, %570 : vector<8x128xf32>
    %578 = arith.addf %564, %577 : vector<8x128xf32>
    %c24_379 = arith.constant 24 : index
    %579 = memref.load %arg2[%c24_379] : memref<27xf32, #tpu.memory_space<smem>>
    %580 = vector.broadcast %579 : f32 to vector<8x128xf32>
    %581 = arith.mulf %580, %570 : vector<8x128xf32>
    %582 = arith.addf %568, %581 : vector<8x128xf32>
    %c13_380 = arith.constant 13 : index
    %c0_381 = arith.constant 0 : index
    %c0_382 = arith.constant 0 : index
    %583 = vector.load %arg4[%c13_380, %c0_381, %c0_382] : memref<16x8x128xf32, #tpu.memory_space<vmem>>, vector<1x8x128xf32>
    %584 = vector.shape_cast %583 : vector<1x8x128xf32> to vector<8x128xf32>
    %c7_383 = arith.constant 7 : index
    %585 = memref.load %arg2[%c7_383] : memref<27xf32, #tpu.memory_space<smem>>
    %586 = vector.broadcast %585 : f32 to vector<8x128xf32>
    %587 = arith.mulf %586, %584 : vector<8x128xf32>
    %588 = arith.addf %574, %587 : vector<8x128xf32>
    %c16_384 = arith.constant 16 : index
    %589 = memref.load %arg2[%c16_384] : memref<27xf32, #tpu.memory_space<smem>>
    %590 = vector.broadcast %589 : f32 to vector<8x128xf32>
    %591 = arith.mulf %590, %584 : vector<8x128xf32>
    %592 = arith.addf %578, %591 : vector<8x128xf32>
    %c25_385 = arith.constant 25 : index
    %593 = memref.load %arg2[%c25_385] : memref<27xf32, #tpu.memory_space<smem>>
    %594 = vector.broadcast %593 : f32 to vector<8x128xf32>
    %595 = arith.mulf %594, %584 : vector<8x128xf32>
    %596 = arith.addf %582, %595 : vector<8x128xf32>
    %c14_386 = arith.constant 14 : index
    %c0_387 = arith.constant 0 : index
    %c0_388 = arith.constant 0 : index
    %597 = vector.load %arg4[%c14_386, %c0_387, %c0_388] : memref<16x8x128xf32, #tpu.memory_space<vmem>>, vector<1x8x128xf32>
    %598 = vector.shape_cast %597 : vector<1x8x128xf32> to vector<8x128xf32>
    %c8_389 = arith.constant 8 : index
    %599 = memref.load %arg2[%c8_389] : memref<27xf32, #tpu.memory_space<smem>>
    %600 = vector.broadcast %599 : f32 to vector<8x128xf32>
    %601 = arith.mulf %600, %598 : vector<8x128xf32>
    %602 = arith.addf %588, %601 : vector<8x128xf32>
    %c17_390 = arith.constant 17 : index
    %603 = memref.load %arg2[%c17_390] : memref<27xf32, #tpu.memory_space<smem>>
    %604 = vector.broadcast %603 : f32 to vector<8x128xf32>
    %605 = arith.mulf %604, %598 : vector<8x128xf32>
    %606 = arith.addf %592, %605 : vector<8x128xf32>
    %c26_391 = arith.constant 26 : index
    %607 = memref.load %arg2[%c26_391] : memref<27xf32, #tpu.memory_space<smem>>
    %608 = vector.broadcast %607 : f32 to vector<8x128xf32>
    %609 = arith.mulf %608, %598 : vector<8x128xf32>
    %610 = arith.addf %596, %609 : vector<8x128xf32>
    %611 = arith.mulf %602, %169 : vector<8x128xf32>
    %c0_392 = arith.constant 0 : index
    %c0_393 = arith.constant 0 : index
    %612 = vector.load %arg3[%c0_392, %c0_393] : memref<8x128xf32, #tpu.memory_space<vmem>>, vector<1x128xf32>
    %cst_394 = arith.constant dense<0.000000e+00> : vector<128xf32>
    %613 = vector.multi_reduction <add>, %611, %cst_394 [0] : vector<8x128xf32> to vector<128xf32>
    %614 = vector.shape_cast %613 : vector<128xf32> to vector<1x128xf32>
    %615 = arith.addf %612, %614 : vector<1x128xf32>
    %c0_395 = arith.constant 0 : index
    %c0_396 = arith.constant 0 : index
    %616 = vector.load %arg3[%c0_395, %c0_396] : memref<8x128xf32, #tpu.memory_space<vmem>>, vector<1x128xf32>
    tpu.vector_store %arg3[%c0_395, %c0_396], %615 {strides = array<i32>} : memref<8x128xf32, #tpu.memory_space<vmem>>, vector<1x128xf32>,
    %c3_397 = arith.constant 3 : index
    %c0_398 = arith.constant 0 : index
    %617 = vector.load %arg3[%c3_397, %c0_398] : memref<8x128xf32, #tpu.memory_space<vmem>>, vector<1x128xf32>
    %618 = arith.mulf %611, %602 : vector<8x128xf32>
    %cst_399 = arith.constant dense<0.000000e+00> : vector<128xf32>
    %619 = vector.multi_reduction <add>, %618, %cst_399 [0] : vector<8x128xf32> to vector<128xf32>
    %620 = vector.shape_cast %619 : vector<128xf32> to vector<1x128xf32>
    %621 = arith.addf %617, %620 : vector<1x128xf32>
    %c3_400 = arith.constant 3 : index
    %c0_401 = arith.constant 0 : index
    %622 = vector.load %arg3[%c3_400, %c0_401] : memref<8x128xf32, #tpu.memory_space<vmem>>, vector<1x128xf32>
    tpu.vector_store %arg3[%c3_400, %c0_401], %621 {strides = array<i32>} : memref<8x128xf32, #tpu.memory_space<vmem>>, vector<1x128xf32>,
    %623 = arith.mulf %606, %169 : vector<8x128xf32>
    %c1_402 = arith.constant 1 : index
    %c0_403 = arith.constant 0 : index
    %624 = vector.load %arg3[%c1_402, %c0_403] : memref<8x128xf32, #tpu.memory_space<vmem>>, vector<1x128xf32>
    %cst_404 = arith.constant dense<0.000000e+00> : vector<128xf32>
    %625 = vector.multi_reduction <add>, %623, %cst_404 [0] : vector<8x128xf32> to vector<128xf32>
    %626 = vector.shape_cast %625 : vector<128xf32> to vector<1x128xf32>
    %627 = arith.addf %624, %626 : vector<1x128xf32>
    %c1_405 = arith.constant 1 : index
    %c0_406 = arith.constant 0 : index
    %628 = vector.load %arg3[%c1_405, %c0_406] : memref<8x128xf32, #tpu.memory_space<vmem>>, vector<1x128xf32>
    tpu.vector_store %arg3[%c1_405, %c0_406], %627 {strides = array<i32>} : memref<8x128xf32, #tpu.memory_space<vmem>>, vector<1x128xf32>,
    %c4_407 = arith.constant 4 : index
    %c0_408 = arith.constant 0 : index
    %629 = vector.load %arg3[%c4_407, %c0_408] : memref<8x128xf32, #tpu.memory_space<vmem>>, vector<1x128xf32>
    %630 = arith.mulf %623, %606 : vector<8x128xf32>
    %cst_409 = arith.constant dense<0.000000e+00> : vector<128xf32>
    %631 = vector.multi_reduction <add>, %630, %cst_409 [0] : vector<8x128xf32> to vector<128xf32>
    %632 = vector.shape_cast %631 : vector<128xf32> to vector<1x128xf32>
    %633 = arith.addf %629, %632 : vector<1x128xf32>
    %c4_410 = arith.constant 4 : index
    %c0_411 = arith.constant 0 : index
    %634 = vector.load %arg3[%c4_410, %c0_411] : memref<8x128xf32, #tpu.memory_space<vmem>>, vector<1x128xf32>
    tpu.vector_store %arg3[%c4_410, %c0_411], %633 {strides = array<i32>} : memref<8x128xf32, #tpu.memory_space<vmem>>, vector<1x128xf32>,
    %635 = arith.mulf %610, %169 : vector<8x128xf32>
    %c2_412 = arith.constant 2 : index
    %c0_413 = arith.constant 0 : index
    %636 = vector.load %arg3[%c2_412, %c0_413] : memref<8x128xf32, #tpu.memory_space<vmem>>, vector<1x128xf32>
    %cst_414 = arith.constant dense<0.000000e+00> : vector<128xf32>
    %637 = vector.multi_reduction <add>, %635, %cst_414 [0] : vector<8x128xf32> to vector<128xf32>
    %638 = vector.shape_cast %637 : vector<128xf32> to vector<1x128xf32>
    %639 = arith.addf %636, %638 : vector<1x128xf32>
    %c2_415 = arith.constant 2 : index
    %c0_416 = arith.constant 0 : index
    %640 = vector.load %arg3[%c2_415, %c0_416] : memref<8x128xf32, #tpu.memory_space<vmem>>, vector<1x128xf32>
    tpu.vector_store %arg3[%c2_415, %c0_416], %639 {strides = array<i32>} : memref<8x128xf32, #tpu.memory_space<vmem>>, vector<1x128xf32>,
    %c5_417 = arith.constant 5 : index
    %c0_418 = arith.constant 0 : index
    %641 = vector.load %arg3[%c5_417, %c0_418] : memref<8x128xf32, #tpu.memory_space<vmem>>, vector<1x128xf32>
    %642 = arith.mulf %635, %610 : vector<8x128xf32>
    %cst_419 = arith.constant dense<0.000000e+00> : vector<128xf32>
    %643 = vector.multi_reduction <add>, %642, %cst_419 [0] : vector<8x128xf32> to vector<128xf32>
    %644 = vector.shape_cast %643 : vector<128xf32> to vector<1x128xf32>
    %645 = arith.addf %641, %644 : vector<1x128xf32>
    %c5_420 = arith.constant 5 : index
    %c0_421 = arith.constant 0 : index
    %646 = vector.load %arg3[%c5_420, %c0_421] : memref<8x128xf32, #tpu.memory_space<vmem>>, vector<1x128xf32>
    tpu.vector_store %arg3[%c5_420, %c0_421], %645 {strides = array<i32>} : memref<8x128xf32, #tpu.memory_space<vmem>>, vector<1x128xf32>,
    %c5_422 = arith.constant 5 : index
    %c0_423 = arith.constant 0 : index
    %c0_424 = arith.constant 0 : index
    %647 = vector.load %arg4[%c5_422, %c0_423, %c0_424] : memref<16x8x128xf32, #tpu.memory_space<vmem>>, vector<1x8x128xf32>
    %648 = vector.shape_cast %647 : vector<1x8x128xf32> to vector<8x128xf32>
    %c0_425 = arith.constant 0 : index
    %649 = memref.load %arg2[%c0_425] : memref<27xf32, #tpu.memory_space<smem>>
    %650 = vector.broadcast %649 : f32 to vector<8x128xf32>
    %651 = arith.mulf %650, %648 : vector<8x128xf32>
    %c9_426 = arith.constant 9 : index
    %652 = memref.load %arg2[%c9_426] : memref<27xf32, #tpu.memory_space<smem>>
    %653 = vector.broadcast %652 : f32 to vector<8x128xf32>
    %654 = arith.mulf %653, %648 : vector<8x128xf32>
    %c18_427 = arith.constant 18 : index
    %655 = memref.load %arg2[%c18_427] : memref<27xf32, #tpu.memory_space<smem>>
    %656 = vector.broadcast %655 : f32 to vector<8x128xf32>
    %657 = arith.mulf %656, %648 : vector<8x128xf32>
    %c6_428 = arith.constant 6 : index
    %c0_429 = arith.constant 0 : index
    %c0_430 = arith.constant 0 : index
    %658 = vector.load %arg4[%c6_428, %c0_429, %c0_430] : memref<16x8x128xf32, #tpu.memory_space<vmem>>, vector<1x8x128xf32>
    %659 = vector.shape_cast %658 : vector<1x8x128xf32> to vector<8x128xf32>
    %c1_431 = arith.constant 1 : index
    %660 = memref.load %arg2[%c1_431] : memref<27xf32, #tpu.memory_space<smem>>
    %661 = vector.broadcast %660 : f32 to vector<8x128xf32>
    %662 = arith.mulf %661, %659 : vector<8x128xf32>
    %663 = arith.addf %651, %662 : vector<8x128xf32>
    %c10_432 = arith.constant 10 : index
    %664 = memref.load %arg2[%c10_432] : memref<27xf32, #tpu.memory_space<smem>>
    %665 = vector.broadcast %664 : f32 to vector<8x128xf32>
    %666 = arith.mulf %665, %659 : vector<8x128xf32>
    %667 = arith.addf %654, %666 : vector<8x128xf32>
    %c19_433 = arith.constant 19 : index
    %668 = memref.load %arg2[%c19_433] : memref<27xf32, #tpu.memory_space<smem>>
    %669 = vector.broadcast %668 : f32 to vector<8x128xf32>
    %670 = arith.mulf %669, %659 : vector<8x128xf32>
    %671 = arith.addf %657, %670 : vector<8x128xf32>
    %c7_434 = arith.constant 7 : index
    %c0_435 = arith.constant 0 : index
    %c0_436 = arith.constant 0 : index
    %672 = vector.load %arg4[%c7_434, %c0_435, %c0_436] : memref<16x8x128xf32, #tpu.memory_space<vmem>>, vector<1x8x128xf32>
    %673 = vector.shape_cast %672 : vector<1x8x128xf32> to vector<8x128xf32>
    %c2_437 = arith.constant 2 : index
    %674 = memref.load %arg2[%c2_437] : memref<27xf32, #tpu.memory_space<smem>>
    %675 = vector.broadcast %674 : f32 to vector<8x128xf32>
    %676 = arith.mulf %675, %673 : vector<8x128xf32>
    %677 = arith.addf %663, %676 : vector<8x128xf32>
    %c11_438 = arith.constant 11 : index
    %678 = memref.load %arg2[%c11_438] : memref<27xf32, #tpu.memory_space<smem>>
    %679 = vector.broadcast %678 : f32 to vector<8x128xf32>
    %680 = arith.mulf %679, %673 : vector<8x128xf32>
    %681 = arith.addf %667, %680 : vector<8x128xf32>
    %c20_439 = arith.constant 20 : index
    %682 = memref.load %arg2[%c20_439] : memref<27xf32, #tpu.memory_space<smem>>
    %683 = vector.broadcast %682 : f32 to vector<8x128xf32>
    %684 = arith.mulf %683, %673 : vector<8x128xf32>
    %685 = arith.addf %671, %684 : vector<8x128xf32>
    %c9_440 = arith.constant 9 : index
    %c0_441 = arith.constant 0 : index
    %c0_442 = arith.constant 0 : index
    %686 = vector.load %arg4[%c9_440, %c0_441, %c0_442] : memref<16x8x128xf32, #tpu.memory_space<vmem>>, vector<1x8x128xf32>
    %687 = vector.shape_cast %686 : vector<1x8x128xf32> to vector<8x128xf32>
    %c3_443 = arith.constant 3 : index
    %688 = memref.load %arg2[%c3_443] : memref<27xf32, #tpu.memory_space<smem>>
    %689 = vector.broadcast %688 : f32 to vector<8x128xf32>
    %690 = arith.mulf %689, %687 : vector<8x128xf32>
    %691 = arith.addf %677, %690 : vector<8x128xf32>
    %c12_444 = arith.constant 12 : index
    %692 = memref.load %arg2[%c12_444] : memref<27xf32, #tpu.memory_space<smem>>
    %693 = vector.broadcast %692 : f32 to vector<8x128xf32>
    %694 = arith.mulf %693, %687 : vector<8x128xf32>
    %695 = arith.addf %681, %694 : vector<8x128xf32>
    %c21_445 = arith.constant 21 : index
    %696 = memref.load %arg2[%c21_445] : memref<27xf32, #tpu.memory_space<smem>>
    %697 = vector.broadcast %696 : f32 to vector<8x128xf32>
    %698 = arith.mulf %697, %687 : vector<8x128xf32>
    %699 = arith.addf %685, %698 : vector<8x128xf32>
    %c10_446 = arith.constant 10 : index
    %c0_447 = arith.constant 0 : index
    %c0_448 = arith.constant 0 : index
    %700 = vector.load %arg4[%c10_446, %c0_447, %c0_448] : memref<16x8x128xf32, #tpu.memory_space<vmem>>, vector<1x8x128xf32>
    %701 = vector.shape_cast %700 : vector<1x8x128xf32> to vector<8x128xf32>
    %c4_449 = arith.constant 4 : index
    %702 = memref.load %arg2[%c4_449] : memref<27xf32, #tpu.memory_space<smem>>
    %703 = vector.broadcast %702 : f32 to vector<8x128xf32>
    %704 = arith.mulf %703, %701 : vector<8x128xf32>
    %705 = arith.addf %691, %704 : vector<8x128xf32>
    %c13_450 = arith.constant 13 : index
    %706 = memref.load %arg2[%c13_450] : memref<27xf32, #tpu.memory_space<smem>>
    %707 = vector.broadcast %706 : f32 to vector<8x128xf32>
    %708 = arith.mulf %707, %701 : vector<8x128xf32>
    %709 = arith.addf %695, %708 : vector<8x128xf32>
    %c22_451 = arith.constant 22 : index
    %710 = memref.load %arg2[%c22_451] : memref<27xf32, #tpu.memory_space<smem>>
    %711 = vector.broadcast %710 : f32 to vector<8x128xf32>
    %712 = arith.mulf %711, %701 : vector<8x128xf32>
    %713 = arith.addf %699, %712 : vector<8x128xf32>
    %c11_452 = arith.constant 11 : index
    %c0_453 = arith.constant 0 : index
    %c0_454 = arith.constant 0 : index
    %714 = vector.load %arg4[%c11_452, %c0_453, %c0_454] : memref<16x8x128xf32, #tpu.memory_space<vmem>>, vector<1x8x128xf32>
    %715 = vector.shape_cast %714 : vector<1x8x128xf32> to vector<8x128xf32>
    %c5_455 = arith.constant 5 : index
    %716 = memref.load %arg2[%c5_455] : memref<27xf32, #tpu.memory_space<smem>>
    %717 = vector.broadcast %716 : f32 to vector<8x128xf32>
    %718 = arith.mulf %717, %715 : vector<8x128xf32>
    %719 = arith.addf %705, %718 : vector<8x128xf32>
    %c14_456 = arith.constant 14 : index
    %720 = memref.load %arg2[%c14_456] : memref<27xf32, #tpu.memory_space<smem>>
    %721 = vector.broadcast %720 : f32 to vector<8x128xf32>
    %722 = arith.mulf %721, %715 : vector<8x128xf32>
    %723 = arith.addf %709, %722 : vector<8x128xf32>
    %c23_457 = arith.constant 23 : index
    %724 = memref.load %arg2[%c23_457] : memref<27xf32, #tpu.memory_space<smem>>
    %725 = vector.broadcast %724 : f32 to vector<8x128xf32>
    %726 = arith.mulf %725, %715 : vector<8x128xf32>
    %727 = arith.addf %713, %726 : vector<8x128xf32>
    %c13_458 = arith.constant 13 : index
    %c0_459 = arith.constant 0 : index
    %c0_460 = arith.constant 0 : index
    %728 = vector.load %arg4[%c13_458, %c0_459, %c0_460] : memref<16x8x128xf32, #tpu.memory_space<vmem>>, vector<1x8x128xf32>
    %729 = vector.shape_cast %728 : vector<1x8x128xf32> to vector<8x128xf32>
    %c6_461 = arith.constant 6 : index
    %730 = memref.load %arg2[%c6_461] : memref<27xf32, #tpu.memory_space<smem>>
    %731 = vector.broadcast %730 : f32 to vector<8x128xf32>
    %732 = arith.mulf %731, %729 : vector<8x128xf32>
    %733 = arith.addf %719, %732 : vector<8x128xf32>
    %c15_462 = arith.constant 15 : index
    %734 = memref.load %arg2[%c15_462] : memref<27xf32, #tpu.memory_space<smem>>
    %735 = vector.broadcast %734 : f32 to vector<8x128xf32>
    %736 = arith.mulf %735, %729 : vector<8x128xf32>
    %737 = arith.addf %723, %736 : vector<8x128xf32>
    %c24_463 = arith.constant 24 : index
    %738 = memref.load %arg2[%c24_463] : memref<27xf32, #tpu.memory_space<smem>>
    %739 = vector.broadcast %738 : f32 to vector<8x128xf32>
    %740 = arith.mulf %739, %729 : vector<8x128xf32>
    %741 = arith.addf %727, %740 : vector<8x128xf32>
    %c14_464 = arith.constant 14 : index
    %c0_465 = arith.constant 0 : index
    %c0_466 = arith.constant 0 : index
    %742 = vector.load %arg4[%c14_464, %c0_465, %c0_466] : memref<16x8x128xf32, #tpu.memory_space<vmem>>, vector<1x8x128xf32>
    %743 = vector.shape_cast %742 : vector<1x8x128xf32> to vector<8x128xf32>
    %c7_467 = arith.constant 7 : index
    %744 = memref.load %arg2[%c7_467] : memref<27xf32, #tpu.memory_space<smem>>
    %745 = vector.broadcast %744 : f32 to vector<8x128xf32>
    %746 = arith.mulf %745, %743 : vector<8x128xf32>
    %747 = arith.addf %733, %746 : vector<8x128xf32>
    %c16_468 = arith.constant 16 : index
    %748 = memref.load %arg2[%c16_468] : memref<27xf32, #tpu.memory_space<smem>>
    %749 = vector.broadcast %748 : f32 to vector<8x128xf32>
    %750 = arith.mulf %749, %743 : vector<8x128xf32>
    %751 = arith.addf %737, %750 : vector<8x128xf32>
    %c25_469 = arith.constant 25 : index
    %752 = memref.load %arg2[%c25_469] : memref<27xf32, #tpu.memory_space<smem>>
    %753 = vector.broadcast %752 : f32 to vector<8x128xf32>
    %754 = arith.mulf %753, %743 : vector<8x128xf32>
    %755 = arith.addf %741, %754 : vector<8x128xf32>
    %c15_470 = arith.constant 15 : index
    %c0_471 = arith.constant 0 : index
    %c0_472 = arith.constant 0 : index
    %756 = vector.load %arg4[%c15_470, %c0_471, %c0_472] : memref<16x8x128xf32, #tpu.memory_space<vmem>>, vector<1x8x128xf32>
    %757 = vector.shape_cast %756 : vector<1x8x128xf32> to vector<8x128xf32>
    %c8_473 = arith.constant 8 : index
    %758 = memref.load %arg2[%c8_473] : memref<27xf32, #tpu.memory_space<smem>>
    %759 = vector.broadcast %758 : f32 to vector<8x128xf32>
    %760 = arith.mulf %759, %757 : vector<8x128xf32>
    %761 = arith.addf %747, %760 : vector<8x128xf32>
    %c17_474 = arith.constant 17 : index
    %762 = memref.load %arg2[%c17_474] : memref<27xf32, #tpu.memory_space<smem>>
    %763 = vector.broadcast %762 : f32 to vector<8x128xf32>
    %764 = arith.mulf %763, %757 : vector<8x128xf32>
    %765 = arith.addf %751, %764 : vector<8x128xf32>
    %c26_475 = arith.constant 26 : index
    %766 = memref.load %arg2[%c26_475] : memref<27xf32, #tpu.memory_space<smem>>
    %767 = vector.broadcast %766 : f32 to vector<8x128xf32>
    %768 = arith.mulf %767, %757 : vector<8x128xf32>
    %769 = arith.addf %755, %768 : vector<8x128xf32>
    %770 = arith.mulf %761, %169 : vector<8x128xf32>
    %c0_476 = arith.constant 0 : index
    %c0_477 = arith.constant 0 : index
    %771 = vector.load %arg3[%c0_476, %c0_477] : memref<8x128xf32, #tpu.memory_space<vmem>>, vector<1x128xf32>
    %cst_478 = arith.constant dense<0.000000e+00> : vector<128xf32>
    %772 = vector.multi_reduction <add>, %770, %cst_478 [0] : vector<8x128xf32> to vector<128xf32>
    %773 = vector.shape_cast %772 : vector<128xf32> to vector<1x128xf32>
    %774 = arith.addf %771, %773 : vector<1x128xf32>
    %c0_479 = arith.constant 0 : index
    %c0_480 = arith.constant 0 : index
    %775 = vector.load %arg3[%c0_479, %c0_480] : memref<8x128xf32, #tpu.memory_space<vmem>>, vector<1x128xf32>
    tpu.vector_store %arg3[%c0_479, %c0_480], %774 {strides = array<i32>} : memref<8x128xf32, #tpu.memory_space<vmem>>, vector<1x128xf32>,
    %c3_481 = arith.constant 3 : index
    %c0_482 = arith.constant 0 : index
    %776 = vector.load %arg3[%c3_481, %c0_482] : memref<8x128xf32, #tpu.memory_space<vmem>>, vector<1x128xf32>
    %777 = arith.mulf %770, %761 : vector<8x128xf32>
    %cst_483 = arith.constant dense<0.000000e+00> : vector<128xf32>
    %778 = vector.multi_reduction <add>, %777, %cst_483 [0] : vector<8x128xf32> to vector<128xf32>
    %779 = vector.shape_cast %778 : vector<128xf32> to vector<1x128xf32>
    %780 = arith.addf %776, %779 : vector<1x128xf32>
    %c3_484 = arith.constant 3 : index
    %c0_485 = arith.constant 0 : index
    %781 = vector.load %arg3[%c3_484, %c0_485] : memref<8x128xf32, #tpu.memory_space<vmem>>, vector<1x128xf32>
    tpu.vector_store %arg3[%c3_484, %c0_485], %780 {strides = array<i32>} : memref<8x128xf32, #tpu.memory_space<vmem>>, vector<1x128xf32>,
    %782 = arith.mulf %765, %169 : vector<8x128xf32>
    %c1_486 = arith.constant 1 : index
    %c0_487 = arith.constant 0 : index
    %783 = vector.load %arg3[%c1_486, %c0_487] : memref<8x128xf32, #tpu.memory_space<vmem>>, vector<1x128xf32>
    %cst_488 = arith.constant dense<0.000000e+00> : vector<128xf32>
    %784 = vector.multi_reduction <add>, %782, %cst_488 [0] : vector<8x128xf32> to vector<128xf32>
    %785 = vector.shape_cast %784 : vector<128xf32> to vector<1x128xf32>
    %786 = arith.addf %783, %785 : vector<1x128xf32>
    %c1_489 = arith.constant 1 : index
    %c0_490 = arith.constant 0 : index
    %787 = vector.load %arg3[%c1_489, %c0_490] : memref<8x128xf32, #tpu.memory_space<vmem>>, vector<1x128xf32>
    tpu.vector_store %arg3[%c1_489, %c0_490], %786 {strides = array<i32>} : memref<8x128xf32, #tpu.memory_space<vmem>>, vector<1x128xf32>,
    %c4_491 = arith.constant 4 : index
    %c0_492 = arith.constant 0 : index
    %788 = vector.load %arg3[%c4_491, %c0_492] : memref<8x128xf32, #tpu.memory_space<vmem>>, vector<1x128xf32>
    %789 = arith.mulf %782, %765 : vector<8x128xf32>
    %cst_493 = arith.constant dense<0.000000e+00> : vector<128xf32>
    %790 = vector.multi_reduction <add>, %789, %cst_493 [0] : vector<8x128xf32> to vector<128xf32>
    %791 = vector.shape_cast %790 : vector<128xf32> to vector<1x128xf32>
    %792 = arith.addf %788, %791 : vector<1x128xf32>
    %c4_494 = arith.constant 4 : index
    %c0_495 = arith.constant 0 : index
    %793 = vector.load %arg3[%c4_494, %c0_495] : memref<8x128xf32, #tpu.memory_space<vmem>>, vector<1x128xf32>
    tpu.vector_store %arg3[%c4_494, %c0_495], %792 {strides = array<i32>} : memref<8x128xf32, #tpu.memory_space<vmem>>, vector<1x128xf32>,
    %794 = arith.mulf %769, %169 : vector<8x128xf32>
    %c2_496 = arith.constant 2 : index
    %c0_497 = arith.constant 0 : index
    %795 = vector.load %arg3[%c2_496, %c0_497] : memref<8x128xf32, #tpu.memory_space<vmem>>, vector<1x128xf32>
    %cst_498 = arith.constant dense<0.000000e+00> : vector<128xf32>
    %796 = vector.multi_reduction <add>, %794, %cst_498 [0] : vector<8x128xf32> to vector<128xf32>
    %797 = vector.shape_cast %796 : vector<128xf32> to vector<1x128xf32>
    %798 = arith.addf %795, %797 : vector<1x128xf32>
    %c2_499 = arith.constant 2 : index
    %c0_500 = arith.constant 0 : index
    %799 = vector.load %arg3[%c2_499, %c0_500] : memref<8x128xf32, #tpu.memory_space<vmem>>, vector<1x128xf32>
    tpu.vector_store %arg3[%c2_499, %c0_500], %798 {strides = array<i32>} : memref<8x128xf32, #tpu.memory_space<vmem>>, vector<1x128xf32>,
    %c5_501 = arith.constant 5 : index
    %c0_502 = arith.constant 0 : index
    %800 = vector.load %arg3[%c5_501, %c0_502] : memref<8x128xf32, #tpu.memory_space<vmem>>, vector<1x128xf32>
    %801 = arith.mulf %794, %769 : vector<8x128xf32>
    %cst_503 = arith.constant dense<0.000000e+00> : vector<128xf32>
    %802 = vector.multi_reduction <add>, %801, %cst_503 [0] : vector<8x128xf32> to vector<128xf32>
    %803 = vector.shape_cast %802 : vector<128xf32> to vector<1x128xf32>
    %804 = arith.addf %800, %803 : vector<1x128xf32>
    %c5_504 = arith.constant 5 : index
    %c0_505 = arith.constant 0 : index
    %805 = vector.load %arg3[%c5_504, %c0_505] : memref<8x128xf32, #tpu.memory_space<vmem>>, vector<1x128xf32>
    tpu.vector_store %arg3[%c5_504, %c0_505], %804 {strides = array<i32>} : memref<8x128xf32, #tpu.memory_space<vmem>>, vector<1x128xf32>,
    return
  }
  func.func @transform_0(%arg0: i32) -> (i32, i32, i32, i32) {
    %c0_i32 = arith.constant 0 : i32
    %c0_i32_0 = arith.constant 0 : i32
    %c0_i32_1 = arith.constant 0 : i32
    %c0_i32_2 = arith.constant 0 : i32
    return %arg0, %c0_i32, %c0_i32_0, %c0_i32_1 : i32, i32, i32, i32
  }
  func.func @transform_1(%arg0: i32) -> i32 {
    %c0_i32 = arith.constant 0 : i32
    %c0_i32_0 = arith.constant 0 : i32
    return %c0_i32 : i32
  }
  func.func @transform_2(%arg0: i32) -> (i32, i32) {
    %c0_i32 = arith.constant 0 : i32
    %c0_i32_0 = arith.constant 0 : i32
    %c0_i32_1 = arith.constant 0 : i32
    return %c0_i32, %c0_i32_0 : i32, i32
  }
}

</mosaic_0001>

<llo_original>
// kernel: tpu_custom_call.1
$region0: #{tpu_custom_call.1}
  #allocation0 [shape = 'u32[]', space=smem, size = 0x4, offset = 0x4, fixed_abs, tag = 'smem constant byte address 0x4 - core index']
  #allocation1 [shape = 'u32[144,128]{1,0:T(1,128)}', space=vmem, size = 0x12000, scoped, tag = 'internal scratch']
  #allocation2 [shape = 'f32[16,8,128]{2,1,0:T(8,128)}', space=vmem, size = 0x10000, scoped, tag = 'scratch operand']
  %s0 = inlined_call_operand.hbm [shape: f32[1,5,16,128], index: 0, kind: input, shape index: {}]
  %s1 = inlined_call_operand.vmem [shape: f32[27], index: 1, kind: input, shape index: {}]
  %s2 = inlined_call_operand.hbm [shape: f32[8,128], index: 2, kind: output, shape index: {}]
  %s3 = sld [smem:[#allocation0]]
  $region30: #{tpu_custom_call.1} parent=0
    _
  %s5 = ssub.s32 1, %s3
  %s6 = scalar_select 0, %s5, %s3
  $region1: #{tpu_custom_call.1} parent=0
    #allocation3 [shape = 'u8[40960]{0}', space=vmem, size = 0xa000, scoped, tag = 'input window, operand 0, single buffered']
    #allocation4 [shape = 's32[1]{0}', space=sflag, size = 0x4, scoped, tag = 'scoped memory for tpu_custom_call.1']
    #allocation5 [shape = 's32[1]{0}', space=sflag, size = 0x4, scoped, tag = 'scoped memory for tpu_custom_call.1']
    #allocation6 [shape = 's32[1]{0}', space=sflag, size = 0x4, scoped, tag = 'scoped memory for tpu_custom_call.1']
    #allocation7 [shape = 'u8[512]{0}', space=smem, size = 0x200, scoped, tag = 'input window, operand 1, single buffered']
    #allocation8 [shape = 'u8[4096]{0}', space=vmem, size = 0x1000, scoped, tag = 'output window, operand 0, single buffered']
    %7 = vsyncpa [#allocation4], 0
    %8 = vsyncpa [#allocation6], 0
    %9 = vsyncpa [#allocation5], 0
    // Predicated region
    $region2: #{tpu_custom_call.1} parent=1 // pred_check
      _
    $region3: #{tpu_custom_call.1} parent=1 // pred_check_branch
      %11 = sbr.rel (0) target = $region5
    $region4: #{tpu_custom_call.1} parent=1 // pred_region
      %s13 = ssub.s32 1280, 1280
      %14 = vsyncadd [#allocation4], %s13
      %s15 = sshll.u32 [#allocation3], 4
      %s16 = int_to_ptr.vmem [resolvable:$true] %s15
      %21 = dma.hbm_to_vmem [thread:$0]  %s0, 1280, %s16, [#allocation4], 128, 128, 8
    $region5: #{tpu_custom_call.1} parent=1 // pred_fallthru
      _
    // Predicated region
    $region6: #{tpu_custom_call.1} parent=1 // pred_check
      _
    $region7: #{tpu_custom_call.1} parent=1 // pred_check_branch
      %23 = sbr.rel (0) target = $region9
    $region8: #{tpu_custom_call.1} parent=1 // pred_region
      %s25 = ssub.s32 16, 16
      %26 = vsyncadd [#allocation6], %s25
      %s28 = sshll.u32 %s1, 4
      %s29 = int_to_ptr.vmem [resolvable:$true] %s28
      %31 = dma.vmem_to_smem %s29, 16, [#allocation7], [#allocation6]
    $region9: #{tpu_custom_call.1} parent=1 // pred_fallthru
      _
    // Predicated region
    $region10: #{tpu_custom_call.1} parent=1 // pred_check
      _
    $region11: #{tpu_custom_call.1} parent=1 // pred_check_branch
      %33 = sbr.rel (0) target = $region13
    $region12: #{tpu_custom_call.1} parent=1 // pred_region
      %34 = dma.done [#allocation4], 1280
    $region13: #{tpu_custom_call.1} parent=1 // pred_fallthru
      _
    // Predicated region
    $region14: #{tpu_custom_call.1} parent=1 // pred_check
      _
    $region15: #{tpu_custom_call.1} parent=1 // pred_check_branch
      %36 = sbr.rel (0) target = $region17
    $region16: #{tpu_custom_call.1} parent=1 // pred_region
      %37 = dma.done [#allocation6], 16
    $region17: #{tpu_custom_call.1} parent=1 // pred_fallthru
      _
    %38 = sfence
    %p39 = scmp.eq.s32.totalorder 0, 0
    // Predicated region
    $region18: #{tpu_custom_call.1} parent=1 // pred_check
      %p40 = pneg %p39
    $region19: #{tpu_custom_call.1} parent=1 // pred_check_branch
      %42 = sbr.rel (%p40) target = $region21
    $region20: #{tpu_custom_call.1} parent=1 // pred_region
      %43 = vst [vmem:[#allocation8] sm:$0xff] 0.0
    $region21: #{tpu_custom_call.1} parent=1 // pred_fallthru
      _
    %v44 = vlaneseq
    %v45 = vand.u32 %v44, 127
    %v46 = vld [vmem:[#allocation3] sm:$0xff]
    %47 = vst [vmem:[#allocation2] sm:$0xff] %v46
    %v48 = vld [vmem:[#allocation3] sm:$0xff]
    %v49 = vld [vmem:[#allocation3 + $0x1] sm:$0xff]
    %50 = vrot.lane.b32.xlu0 %v48, 127
    %v51 = vpop.permute.xlu0 %50
    %52 = vrot.lane.b32.xlu0 %v49, 127
    %v53 = vpop.permute.xlu0 %52
    %vm54 = vcmp.lt.s32.totalorder %v45, 127
    %v55 = vsel %vm54, %v51, %v53
    %s56 = scalar_lea.vmem [#allocation2], 16
    %57 = vst [vmem:[%s56] sm:$0xff] %v55
    %v58 = vld [vmem:[#allocation3] sm:$0xff]
    %v59 = vld [vmem:[#allocation3 + $0x1] sm:$0xff]
    %60 = vrot.lane.b32.xlu0 %v58, 119
    %v61 = vpop.permute.xlu0 %60
    %62 = vrot.lane.b32.xlu0 %v59, 119
    %v63 = vpop.permute.xlu0 %62
    %vm64 = vcmp.lt.s32.totalorder %v45, 119
    %v65 = vsel %vm64, %v61, %v63
    %s66 = scalar_lea.vmem [#allocation2], 64
    %67 = vst [vmem:[%s66] sm:$0xff] %v65
    %v68 = vld [vmem:[#allocation3] sm:$0xff]
    %v69 = vld [vmem:[#allocation3 + $0x1] sm:$0xff]
    %70 = vrot.lane.b32.xlu0 %v68, 118
    %v71 = vpop.permute.xlu0 %70
    %72 = vrot.lane.b32.xlu0 %v69, 118
    %v73 = vpop.permute.xlu0 %72
    %vm74 = vcmp.lt.s32.totalorder %v45, 118
    %v75 = vsel %vm74, %v71, %v73
    %s76 = scalar_lea.vmem [#allocation2], 80
    %77 = vst [vmem:[%s76] sm:$0xff] %v75
    %s78 = scalar_lea.vmem [#allocation3], 16
    %v79 = vld [vmem:[%s78] sm:$0xff]
    %s80 = scalar_lea.vmem [#allocation2], 8
    %81 = vst [vmem:[%s80] sm:$0xff] %v79
    %v82 = vld [vmem:[%s78] sm:$0xff]
    %v83 = vld [vmem:[%s78 + $0x1] sm:$0xff]
    %84 = vrot.lane.b32.xlu0 %v82, 127
    %v85 = vpop.permute.xlu0 %84
    %86 = vrot.lane.b32.xlu0 %v83, 127
    %v87 = vpop.permute.xlu0 %86
    %v88 = vsel %vm54, %v85, %v87
    %s89 = scalar_lea.vmem [#allocation2], 24
    %90 = vst [vmem:[%s89] sm:$0xff] %v88
    %v91 = vld [vmem:[%s78] sm:$0xff]
    %v92 = vld [vmem:[%s78 + $0x1] sm:$0xff]
    %93 = vrot.lane.b32.xlu0 %v91, 119
    %v94 = vpop.permute.xlu0 %93
    %95 = vrot.lane.b32.xlu0 %v92, 119
    %v96 = vpop.permute.xlu0 %95
    %v97 = vsel %vm64, %v94, %v96
    %s98 = scalar_lea.vmem [#allocation2], 72
    %99 = vst [vmem:[%s98] sm:$0xff] %v97
    %v100 = vld [vmem:[%s78] sm:$0xff]
    %v101 = vld [vmem:[%s78 + $0x1] sm:$0xff]
    %102 = vrot.lane.b32.xlu0 %v100, 118
    %v103 = vpop.permute.xlu0 %102
    %104 = vrot.lane.b32.xlu0 %v101, 118
    %v105 = vpop.permute.xlu0 %104
    %v106 = vsel %vm74, %v103, %v105
    %s107 = scalar_lea.vmem [#allocation2], 88
    %108 = vst [vmem:[%s107] sm:$0xff] %v106
    %s109 = scalar_lea.vmem [#allocation3], 32
    %v110 = vld [vmem:[%s109] sm:$0xff]
    %s111 = scalar_lea.vmem [#allocation2], 32
    %112 = vst [vmem:[%s111] sm:$0xff] %v110
    %v113 = vld [vmem:[%s109] sm:$0xff]
    %v114 = vld [vmem:[%s109 + $0x1] sm:$0xff]
    %115 = vrot.lane.b32.xlu0 %v113, 127
    %v116 = vpop.permute.xlu0 %115
    %117 = vrot.lane.b32.xlu0 %v114, 127
    %v118 = vpop.permute.xlu0 %117
    %v119 = vsel %vm54, %v116, %v118
    %s120 = scalar_lea.vmem [#allocation2], 48
    %121 = vst [vmem:[%s120] sm:$0xff] %v119
    %v122 = vld [vmem:[%s109] sm:$0xff]
    %v123 = vld [vmem:[%s109 + $0x1] sm:$0xff]
    %124 = vrot.lane.b32.xlu0 %v122, 119
    %v125 = vpop.permute.xlu0 %124
    %126 = vrot.lane.b32.xlu0 %v123, 119
    %v127 = vpop.permute.xlu0 %126
    %v128 = vsel %vm64, %v125, %v127
    %s129 = scalar_lea.vmem [#allocation2], 96
    %130 = vst [vmem:[%s129] sm:$0xff] %v128
    %v131 = vld [vmem:[%s109] sm:$0xff]
    %v132 = vld [vmem:[%s109 + $0x1] sm:$0xff]
    %133 = vrot.lane.b32.xlu0 %v131, 118
    %v134 = vpop.permute.xlu0 %133
    %135 = vrot.lane.b32.xlu0 %v132, 118
    %v136 = vpop.permute.xlu0 %135
    %v137 = vsel %vm74, %v134, %v136
    %s138 = scalar_lea.vmem [#allocation2], 112
    %139 = vst [vmem:[%s138] sm:$0xff] %v137
    %s140 = scalar_lea.vmem [#allocation3], 48
    %v141 = vld [vmem:[%s140] sm:$0xff]
    %s142 = scalar_lea.vmem [#allocation2], 40
    %143 = vst [vmem:[%s142] sm:$0xff] %v141
    %v144 = vld [vmem:[%s140] sm:$0xff]
    %v145 = vld [vmem:[%s140 + $0x1] sm:$0xff]
    %146 = vrot.lane.b32.xlu0 %v144, 127
    %v147 = vpop.permute.xlu0 %146
    %148 = vrot.lane.b32.xlu0 %v145, 127
    %v149 = vpop.permute.xlu0 %148
    %v150 = vsel %vm54, %v147, %v149
    %s151 = scalar_lea.vmem [#allocation2], 56
    %152 = vst [vmem:[%s151] sm:$0xff] %v150
    %v153 = vld [vmem:[%s140] sm:$0xff]
    %v154 = vld [vmem:[%s140 + $0x1] sm:$0xff]
    %155 = vrot.lane.b32.xlu0 %v153, 119
    %v156 = vpop.permute.xlu0 %155
    %157 = vrot.lane.b32.xlu0 %v154, 119
    %v158 = vpop.permute.xlu0 %157
    %v159 = vsel %vm64, %v156, %v158
    %s160 = scalar_lea.vmem [#allocation2], 104
    %161 = vst [vmem:[%s160] sm:$0xff] %v159
    %v162 = vld [vmem:[%s140] sm:$0xff]
    %v163 = vld [vmem:[%s140 + $0x1] sm:$0xff]
    %164 = vrot.lane.b32.xlu0 %v162, 118
    %v165 = vpop.permute.xlu0 %164
    %166 = vrot.lane.b32.xlu0 %v163, 118
    %v167 = vpop.permute.xlu0 %166
    %v168 = vsel %vm74, %v165, %v167
    %s169 = scalar_lea.vmem [#allocation2], 120
    %170 = vst [vmem:[%s169] sm:$0xff] %v168
    %s171 = scalar_lea.vmem [#allocation3], 64
    %v172 = vld [vmem:[%s171] sm:$0xff]
    %v173 = vld [vmem:[#allocation2] sm:$0xff]
    %s174 = sld [smem:[#allocation7]]
    %v175 = vstv %s174
    %v176 = vmul.f32 %v175, %v173
    %s177 = sld [smem:[#allocation7 + $0x9]]
    %v178 = vstv %s177
    %v179 = vmul.f32 %v178, %v173
    %s180 = sld [smem:[#allocation7 + $0x12]]
    %v181 = vstv %s180
    %v182 = vmul.f32 %v181, %v173
    %v183 = vld [vmem:[%s80] sm:$0xff]
    %s184 = sld [smem:[#allocation7 + $0x1]]
    %v185 = vstv %s184
    %v186 = vmul.f32 %v185, %v183
    %v187 = vadd.f32 %v176, %v186
    %s188 = sld [smem:[#allocation7 + $0xa]]
    %v189 = vstv %s188
    %v190 = vmul.f32 %v189, %v183
    %v191 = vadd.f32 %v179, %v190
    %s192 = sld [smem:[#allocation7 + $0x13]]
    %v193 = vstv %s192
    %v194 = vmul.f32 %v193, %v183
    %v195 = vadd.f32 %v182, %v194
    %v196 = vld [vmem:[%s56] sm:$0xff]
    %s197 = sld [smem:[#allocation7 + $0x2]]
    %v198 = vstv %s197
    %v199 = vmul.f32 %v198, %v196
    %v200 = vadd.f32 %v187, %v199
    %s201 = sld [smem:[#allocation7 + $0xb]]
    %v202 = vstv %s201
    %v203 = vmul.f32 %v202, %v196
    %v204 = vadd.f32 %v191, %v203
    %s205 = sld [smem:[#allocation7 + $0x14]]
    %v206 = vstv %s205
    %v207 = vmul.f32 %v206, %v196
    %v208 = vadd.f32 %v195, %v207
    %v209 = vld [vmem:[%s111] sm:$0xff]
    %s210 = sld [smem:[#allocation7 + $0x3]]
    %v211 = vstv %s210
    %v212 = vmul.f32 %v211, %v209
    %v213 = vadd.f32 %v200, %v212
    %s214 = sld [smem:[#allocation7 + $0xc]]
    %v215 = vstv %s214
    %v216 = vmul.f32 %v215, %v209
    %v217 = vadd.f32 %v204, %v216
    %s218 = sld [smem:[#allocation7 + $0x15]]
    %v219 = vstv %s218
    %v220 = vmul.f32 %v219, %v209
    %v221 = vadd.f32 %v208, %v220
    %v222 = vld [vmem:[%s142] sm:$0xff]
    %s223 = sld [smem:[#allocation7 + $0x4]]
    %v224 = vstv %s223
    %v225 = vmul.f32 %v224, %v222
    %v226 = vadd.f32 %v213, %v225
    %s227 = sld [smem:[#allocation7 + $0xd]]
    %v228 = vstv %s227
    %v229 = vmul.f32 %v228, %v222
    %v230 = vadd.f32 %v217, %v229
    %s231 = sld [smem:[#allocation7 + $0x16]]
    %v232 = vstv %s231
    %v233 = vmul.f32 %v232, %v222
    %v234 = vadd.f32 %v221, %v233
    %v235 = vld [vmem:[%s120] sm:$0xff]
    %s236 = sld [smem:[#allocation7 + $0x5]]
    %v237 = vstv %s236
    %v238 = vmul.f32 %v237, %v235
    %v239 = vadd.f32 %v226, %v238
    %s240 = sld [smem:[#allocation7 + $0xe]]
    %v241 = vstv %s240
    %v242 = vmul.f32 %v241, %v235
    %v243 = vadd.f32 %v230, %v242
    %s244 = sld [smem:[#allocation7 + $0x17]]
    %v245 = vstv %s244
    %v246 = vmul.f32 %v245, %v235
    %v247 = vadd.f32 %v234, %v246
    %v248 = vld [vmem:[%s66] sm:$0xff]
    %s249 = sld [smem:[#allocation7 + $0x6]]
    %v250 = vstv %s249
    %v251 = vmul.f32 %v250, %v248
    %v252 = vadd.f32 %v239, %v251
    %s253 = sld [smem:[#allocation7 + $0xf]]
    %v254 = vstv %s253
    %v255 = vmul.f32 %v254, %v248
    %v256 = vadd.f32 %v243, %v255
    %s257 = sld [smem:[#allocation7 + $0x18]]
    %v258 = vstv %s257
    %v259 = vmul.f32 %v258, %v248
    %v260 = vadd.f32 %v247, %v259
    %v261 = vld [vmem:[%s98] sm:$0xff]
    %s262 = sld [smem:[#allocation7 + $0x7]]
    %v263 = vstv %s262
    %v264 = vmul.f32 %v263, %v261
    %v265 = vadd.f32 %v252, %v264
    %s266 = sld [smem:[#allocation7 + $0x10]]
    %v267 = vstv %s266
    %v268 = vmul.f32 %v267, %v261
    %v269 = vadd.f32 %v256, %v268
    %s270 = sld [smem:[#allocation7 + $0x19]]
    %v271 = vstv %s270
    %v272 = vmul.f32 %v271, %v261
    %v273 = vadd.f32 %v260, %v272
    %v274 = vld [vmem:[%s76] sm:$0xff]
    %s275 = sld [smem:[#allocation7 + $0x8]]
    %v276 = vstv %s275
    %v277 = vmul.f32 %v276, %v274
    %v278 = vadd.f32 %v265, %v277
    %s279 = sld [smem:[#allocation7 + $0x11]]
    %v280 = vstv %s279
    %v281 = vmul.f32 %v280, %v274
    %v282 = vadd.f32 %v269, %v281
    %s283 = sld [smem:[#allocation7 + $0x1a]]
    %v284 = vstv %s283
    %v285 = vmul.f32 %v284, %v274
    %v286 = vadd.f32 %v273, %v285
    %v287 = vmul.f32 %v278, %v172
    %v288 = vld [vmem:[#allocation8] sm:$0x1]
    %v289 = vrot.slane %v287, 4
    %v290 = vadd.f32 %v287, %v289
    %v291 = vrot.slane %v290, 2
    %v292 = vadd.f32 %v290, %v291
    %v293 = vrot.slane %v292, 1
    %v294 = vadd.f32 %v292, %v293
    %v295 = vadd.f32 %v288, %v294
    %296 = vst [vmem:[#allocation8] sm:$0x1] %v295
    %v297 = vld [vmem:[#allocation8 + $0x3] sm:$0x1]
    %v298 = vmul.f32 %v287, %v278
    %v299 = vrot.slane %v298, 4
    %v300 = vadd.f32 %v298, %v299
    %v301 = vrot.slane %v300, 2
    %v302 = vadd.f32 %v300, %v301
    %v303 = vrot.slane %v302, 1
    %v304 = vadd.f32 %v302, %v303
    %v305 = vadd.f32 %v297, %v304
    %306 = vst [vmem:[#allocation8 + $0x3] sm:$0x1] %v305
    %v307 = vmul.f32 %v282, %v172
    %v308 = vld [vmem:[#allocation8 + $0x1] sm:$0x1]
    %v309 = vrot.slane %v307, 4
    %v310 = vadd.f32 %v307, %v309
    %v311 = vrot.slane %v310, 2
    %v312 = vadd.f32 %v310, %v311
    %v313 = vrot.slane %v312, 1
    %v314 = vadd.f32 %v312, %v313
    %v315 = vadd.f32 %v308, %v314
    %316 = vst [vmem:[#allocation8 + $0x1] sm:$0x1] %v315
    %v317 = vld [vmem:[#allocation8 + $0x4] sm:$0x1]
    %v318 = vmul.f32 %v307, %v282
    %v319 = vrot.slane %v318, 4
    %v320 = vadd.f32 %v318, %v319
    %v321 = vrot.slane %v320, 2
    %v322 = vadd.f32 %v320, %v321
    %v323 = vrot.slane %v322, 1
    %v324 = vadd.f32 %v322, %v323
    %v325 = vadd.f32 %v317, %v324
    %326 = vst [vmem:[#allocation8 + $0x4] sm:$0x1] %v325
    %v327 = vmul.f32 %v286, %v172
    %v328 = vld [vmem:[#allocation8 + $0x2] sm:$0x1]
    %v329 = vrot.slane %v327, 4
    %v330 = vadd.f32 %v327, %v329
    %v331 = vrot.slane %v330, 2
    %v332 = vadd.f32 %v330, %v331
    %v333 = vrot.slane %v332, 1
    %v334 = vadd.f32 %v332, %v333
    %v335 = vadd.f32 %v328, %v334
    %336 = vst [vmem:[#allocation8 + $0x2] sm:$0x1] %v335
    %v337 = vld [vmem:[#allocation8 + $0x5] sm:$0x1]
    %v338 = vmul.f32 %v327, %v286
    %v339 = vrot.slane %v338, 4
    %v340 = vadd.f32 %v338, %v339
    %v341 = vrot.slane %v340, 2
    %v342 = vadd.f32 %v340, %v341
    %v343 = vrot.slane %v342, 1
    %v344 = vadd.f32 %v342, %v343
    %v345 = vadd.f32 %v337, %v344
    %346 = vst [vmem:[#allocation8 + $0x5] sm:$0x1] %v345
    %v347 = vld [vmem:[%s80] sm:$0xff]
    %s348 = sld [smem:[#allocation7]]
    %v349 = vstv %s348
    %v350 = vmul.f32 %v349, %v347
    %s351 = sld [smem:[#allocation7 + $0x9]]
    %v352 = vstv %s351
    %v353 = vmul.f32 %v352, %v347
    %s354 = sld [smem:[#allocation7 + $0x12]]
    %v355 = vstv %s354
    %v356 = vmul.f32 %v355, %v347
    %v357 = vld [vmem:[%s56] sm:$0xff]
    %s358 = sld [smem:[#allocation7 + $0x1]]
    %v359 = vstv %s358
    %v360 = vmul.f32 %v359, %v357
    %v361 = vadd.f32 %v350, %v360
    %s362 = sld [smem:[#allocation7 + $0xa]]
    %v363 = vstv %s362
    %v364 = vmul.f32 %v363, %v357
    %v365 = vadd.f32 %v353, %v364
    %s366 = sld [smem:[#allocation7 + $0x13]]
    %v367 = vstv %s366
    %v368 = vmul.f32 %v367, %v357
    %v369 = vadd.f32 %v356, %v368
    %v370 = vld [vmem:[%s89] sm:$0xff]
    %s371 = sld [smem:[#allocation7 + $0x2]]
    %v372 = vstv %s371
    %v373 = vmul.f32 %v372, %v370
    %v374 = vadd.f32 %v361, %v373
    %s375 = sld [smem:[#allocation7 + $0xb]]
    %v376 = vstv %s375
    %v377 = vmul.f32 %v376, %v370
    %v378 = vadd.f32 %v365, %v377
    %s379 = sld [smem:[#allocation7 + $0x14]]
    %v380 = vstv %s379
    %v381 = vmul.f32 %v380, %v370
    %v382 = vadd.f32 %v369, %v381
    %v383 = vld [vmem:[%s142] sm:$0xff]
    %s384 = sld [smem:[#allocation7 + $0x3]]
    %v385 = vstv %s384
    %v386 = vmul.f32 %v385, %v383
    %v387 = vadd.f32 %v374, %v386
    %s388 = sld [smem:[#allocation7 + $0xc]]
    %v389 = vstv %s388
    %v390 = vmul.f32 %v389, %v383
    %v391 = vadd.f32 %v378, %v390
    %s392 = sld [smem:[#allocation7 + $0x15]]
    %v393 = vstv %s392
    %v394 = vmul.f32 %v393, %v383
    %v395 = vadd.f32 %v382, %v394
    %v396 = vld [vmem:[%s120] sm:$0xff]
    %s397 = sld [smem:[#allocation7 + $0x4]]
    %v398 = vstv %s397
    %v399 = vmul.f32 %v398, %v396
    %v400 = vadd.f32 %v387, %v399
    %s401 = sld [smem:[#allocation7 + $0xd]]
    %v402 = vstv %s401
    %v403 = vmul.f32 %v402, %v396
    %v404 = vadd.f32 %v391, %v403
    %s405 = sld [smem:[#allocation7 + $0x16]]
    %v406 = vstv %s405
    %v407 = vmul.f32 %v406, %v396
    %v408 = vadd.f32 %v395, %v407
    %v409 = vld [vmem:[%s151] sm:$0xff]
    %s410 = sld [smem:[#allocation7 + $0x5]]
    %v411 = vstv %s410
    %v412 = vmul.f32 %v411, %v409
    %v413 = vadd.f32 %v400, %v412
    %s414 = sld [smem:[#allocation7 + $0xe]]
    %v415 = vstv %s414
    %v416 = vmul.f32 %v415, %v409
    %v417 = vadd.f32 %v404, %v416
    %s418 = sld [smem:[#allocation7 + $0x17]]
    %v419 = vstv %s418
    %v420 = vmul.f32 %v419, %v409
    %v421 = vadd.f32 %v408, %v420
    %v422 = vld [vmem:[%s98] sm:$0xff]
    %s423 = sld [smem:[#allocation7 + $0x6]]
    %v424 = vstv %s423
    %v425 = vmul.f32 %v424, %v422
    %v426 = vadd.f32 %v413, %v425
    %s427 = sld [smem:[#allocation7 + $0xf]]
    %v428 = vstv %s427
    %v429 = vmul.f32 %v428, %v422
    %v430 = vadd.f32 %v417, %v429
    %s431 = sld [smem:[#allocation7 + $0x18]]
    %v432 = vstv %s431
    %v433 = vmul.f32 %v432, %v422
    %v434 = vadd.f32 %v421, %v433
    %v435 = vld [vmem:[%s76] sm:$0xff]
    %s436 = sld [smem:[#allocation7 + $0x7]]
    %v437 = vstv %s436
    %v438 = vmul.f32 %v437, %v435
    %v439 = vadd.f32 %v426, %v438
    %s440 = sld [smem:[#allocation7 + $0x10]]
    %v441 = vstv %s440
    %v442 = vmul.f32 %v441, %v435
    %v443 = vadd.f32 %v430, %v442
    %s444 = sld [smem:[#allocation7 + $0x19]]
    %v445 = vstv %s444
    %v446 = vmul.f32 %v445, %v435
    %v447 = vadd.f32 %v434, %v446
    %v448 = vld [vmem:[%s107] sm:$0xff]
    %s449 = sld [smem:[#allocation7 + $0x8]]
    %v450 = vstv %s449
    %v451 = vmul.f32 %v450, %v448
    %v452 = vadd.f32 %v439, %v451
    %s453 = sld [smem:[#allocation7 + $0x11]]
    %v454 = vstv %s453
    %v455 = vmul.f32 %v454, %v448
    %v456 = vadd.f32 %v443, %v455
    %s457 = sld [smem:[#allocation7 + $0x1a]]
    %v458 = vstv %s457
    %v459 = vmul.f32 %v458, %v448
    %v460 = vadd.f32 %v447, %v459
    %v461 = vmul.f32 %v452, %v172
    %v462 = vld [vmem:[#allocation8] sm:$0x1]
    %v463 = vrot.slane %v461, 4
    %v464 = vadd.f32 %v461, %v463
    %v465 = vrot.slane %v464, 2
    %v466 = vadd.f32 %v464, %v465
    %v467 = vrot.slane %v466, 1
    %v468 = vadd.f32 %v466, %v467
    %v469 = vadd.f32 %v462, %v468
    %470 = vst [vmem:[#allocation8] sm:$0x1] %v469
    %v471 = vld [vmem:[#allocation8 + $0x3] sm:$0x1]
    %v472 = vmul.f32 %v461, %v452
    %v473 = vrot.slane %v472, 4
    %v474 = vadd.f32 %v472, %v473
    %v475 = vrot.slane %v474, 2
    %v476 = vadd.f32 %v474, %v475
    %v477 = vrot.slane %v476, 1
    %v478 = vadd.f32 %v476, %v477
    %v479 = vadd.f32 %v471, %v478
    %480 = vst [vmem:[#allocation8 + $0x3] sm:$0x1] %v479
    %v481 = vmul.f32 %v456, %v172
    %v482 = vld [vmem:[#allocation8 + $0x1] sm:$0x1]
    %v483 = vrot.slane %v481, 4
    %v484 = vadd.f32 %v481, %v483
    %v485 = vrot.slane %v484, 2
    %v486 = vadd.f32 %v484, %v485
    %v487 = vrot.slane %v486, 1
    %v488 = vadd.f32 %v486, %v487
    %v489 = vadd.f32 %v482, %v488
    %490 = vst [vmem:[#allocation8 + $0x1] sm:$0x1] %v489
    %v491 = vld [vmem:[#allocation8 + $0x4] sm:$0x1]
    %v492 = vmul.f32 %v481, %v456
    %v493 = vrot.slane %v492, 4
    %v494 = vadd.f32 %v492, %v493
    %v495 = vrot.slane %v494, 2
    %v496 = vadd.f32 %v494, %v495
    %v497 = vrot.slane %v496, 1
    %v498 = vadd.f32 %v496, %v497
    %v499 = vadd.f32 %v491, %v498
    %500 = vst [vmem:[#allocation8 + $0x4] sm:$0x1] %v499
    %v501 = vmul.f32 %v460, %v172
    %v502 = vld [vmem:[#allocation8 + $0x2] sm:$0x1]
    %v503 = vrot.slane %v501, 4
    %v504 = vadd.f32 %v501, %v503
    %v505 = vrot.slane %v504, 2
    %v506 = vadd.f32 %v504, %v505
    %v507 = vrot.slane %v506, 1
    %v508 = vadd.f32 %v506, %v507
    %v509 = vadd.f32 %v502, %v508
    %510 = vst [vmem:[#allocation8 + $0x2] sm:$0x1] %v509
    %v511 = vld [vmem:[#allocation8 + $0x5] sm:$0x1]
    %v512 = vmul.f32 %v501, %v460
    %v513 = vrot.slane %v512, 4
    %v514 = vadd.f32 %v512, %v513
    %v515 = vrot.slane %v514, 2
    %v516 = vadd.f32 %v514, %v515
    %v517 = vrot.slane %v516, 1
    %v518 = vadd.f32 %v516, %v517
    %v519 = vadd.f32 %v511, %v518
    %520 = vst [vmem:[#allocation8 + $0x5] sm:$0x1] %v519
    %v521 = vld [vmem:[%s111] sm:$0xff]
    %s522 = sld [smem:[#allocation7]]
    %v523 = vstv %s522
    %v524 = vmul.f32 %v523, %v521
    %s525 = sld [smem:[#allocation7 + $0x9]]
    %v526 = vstv %s525
    %v527 = vmul.f32 %v526, %v521
    %s528 = sld [smem:[#allocation7 + $0x12]]
    %v529 = vstv %s528
    %v530 = vmul.f32 %v529, %v521
    %v531 = vld [vmem:[%s142] sm:$0xff]
    %s532 = sld [smem:[#allocation7 + $0x1]]
    %v533 = vstv %s532
    %v534 = vmul.f32 %v533, %v531
    %v535 = vadd.f32 %v524, %v534
    %s536 = sld [smem:[#allocation7 + $0xa]]
    %v537 = vstv %s536
    %v538 = vmul.f32 %v537, %v531
    %v539 = vadd.f32 %v527, %v538
    %s540 = sld [smem:[#allocation7 + $0x13]]
    %v541 = vstv %s540
    %v542 = vmul.f32 %v541, %v531
    %v543 = vadd.f32 %v530, %v542
    %v544 = vld [vmem:[%s120] sm:$0xff]
    %s545 = sld [smem:[#allocation7 + $0x2]]
    %v546 = vstv %s545
    %v547 = vmul.f32 %v546, %v544
    %v548 = vadd.f32 %v535, %v547
    %s549 = sld [smem:[#allocation7 + $0xb]]
    %v550 = vstv %s549
    %v551 = vmul.f32 %v550, %v544
    %v552 = vadd.f32 %v539, %v551
    %s553 = sld [smem:[#allocation7 + $0x14]]
    %v554 = vstv %s553
    %v555 = vmul.f32 %v554, %v544
    %v556 = vadd.f32 %v543, %v555
    %v557 = vld [vmem:[%s66] sm:$0xff]
    %s558 = sld [smem:[#allocation7 + $0x3]]
    %v559 = vstv %s558
    %v560 = vmul.f32 %v559, %v557
    %v561 = vadd.f32 %v548, %v560
    %s562 = sld [smem:[#allocation7 + $0xc]]
    %v563 = vstv %s562
    %v564 = vmul.f32 %v563, %v557
    %v565 = vadd.f32 %v552, %v564
    %s566 = sld [smem:[#allocation7 + $0x15]]
    %v567 = vstv %s566
    %v568 = vmul.f32 %v567, %v557
    %v569 = vadd.f32 %v556, %v568
    %v570 = vld [vmem:[%s98] sm:$0xff]
    %s571 = sld [smem:[#allocation7 + $0x4]]
    %v572 = vstv %s571
    %v573 = vmul.f32 %v572, %v570
    %v574 = vadd.f32 %v561, %v573
    %s575 = sld [smem:[#allocation7 + $0xd]]
    %v576 = vstv %s575
    %v577 = vmul.f32 %v576, %v570
    %v578 = vadd.f32 %v565, %v577
    %s579 = sld [smem:[#allocation7 + $0x16]]
    %v580 = vstv %s579
    %v581 = vmul.f32 %v580, %v570
    %v582 = vadd.f32 %v569, %v581
    %v583 = vld [vmem:[%s76] sm:$0xff]
    %s584 = sld [smem:[#allocation7 + $0x5]]
    %v585 = vstv %s584
    %v586 = vmul.f32 %v585, %v583
    %v587 = vadd.f32 %v574, %v586
    %s588 = sld [smem:[#allocation7 + $0xe]]
    %v589 = vstv %s588
    %v590 = vmul.f32 %v589, %v583
    %v591 = vadd.f32 %v578, %v590
    %s592 = sld [smem:[#allocation7 + $0x17]]
    %v593 = vstv %s592
    %v594 = vmul.f32 %v593, %v583
    %v595 = vadd.f32 %v582, %v594
    %v596 = vld [vmem:[%s129] sm:$0xff]
    %s597 = sld [smem:[#allocation7 + $0x6]]
    %v598 = vstv %s597
    %v599 = vmul.f32 %v598, %v596
    %v600 = vadd.f32 %v587, %v599
    %s601 = sld [smem:[#allocation7 + $0xf]]
    %v602 = vstv %s601
    %v603 = vmul.f32 %v602, %v596
    %v604 = vadd.f32 %v591, %v603
    %s605 = sld [smem:[#allocation7 + $0x18]]
    %v606 = vstv %s605
    %v607 = vmul.f32 %v606, %v596
    %v608 = vadd.f32 %v595, %v607
    %v609 = vld [vmem:[%s160] sm:$0xff]
    %s610 = sld [smem:[#allocation7 + $0x7]]
    %v611 = vstv %s610
    %v612 = vmul.f32 %v611, %v609
    %v613 = vadd.f32 %v600, %v612
    %s614 = sld [smem:[#allocation7 + $0x10]]
    %v615 = vstv %s614
    %v616 = vmul.f32 %v615, %v609
    %v617 = vadd.f32 %v604, %v616
    %s618 = sld [smem:[#allocation7 + $0x19]]
    %v619 = vstv %s618
    %v620 = vmul.f32 %v619, %v609
    %v621 = vadd.f32 %v608, %v620
    %v622 = vld [vmem:[%s138] sm:$0xff]
    %s623 = sld [smem:[#allocation7 + $0x8]]
    %v624 = vstv %s623
    %v625 = vmul.f32 %v624, %v622
    %v626 = vadd.f32 %v613, %v625
    %s627 = sld [smem:[#allocation7 + $0x11]]
    %v628 = vstv %s627
    %v629 = vmul.f32 %v628, %v622
    %v630 = vadd.f32 %v617, %v629
    %s631 = sld [smem:[#allocation7 + $0x1a]]
    %v632 = vstv %s631
    %v633 = vmul.f32 %v632, %v622
    %v634 = vadd.f32 %v621, %v633
    %v635 = vmul.f32 %v626, %v172
    %v636 = vld [vmem:[#allocation8] sm:$0x1]
    %v637 = vrot.slane %v635, 4
    %v638 = vadd.f32 %v635, %v637
    %v639 = vrot.slane %v638, 2
    %v640 = vadd.f32 %v638, %v639
    %v641 = vrot.slane %v640, 1
    %v642 = vadd.f32 %v640, %v641
    %v643 = vadd.f32 %v636, %v642
    %644 = vst [vmem:[#allocation8] sm:$0x1] %v643
    %v645 = vld [vmem:[#allocation8 + $0x3] sm:$0x1]
    %v646 = vmul.f32 %v635, %v626
    %v647 = vrot.slane %v646, 4
    %v648 = vadd.f32 %v646, %v647
    %v649 = vrot.slane %v648, 2
    %v650 = vadd.f32 %v648, %v649
    %v651 = vrot.slane %v650, 1
    %v652 = vadd.f32 %v650, %v651
    %v653 = vadd.f32 %v645, %v652
    %654 = vst [vmem:[#allocation8 + $0x3] sm:$0x1] %v653
    %v655 = vmul.f32 %v630, %v172
    %v656 = vld [vmem:[#allocation8 + $0x1] sm:$0x1]
    %v657 = vrot.slane %v655, 4
    %v658 = vadd.f32 %v655, %v657
    %v659 = vrot.slane %v658, 2
    %v660 = vadd.f32 %v658, %v659
    %v661 = vrot.slane %v660, 1
    %v662 = vadd.f32 %v660, %v661
    %v663 = vadd.f32 %v656, %v662
    %664 = vst [vmem:[#allocation8 + $0x1] sm:$0x1] %v663
    %v665 = vld [vmem:[#allocation8 + $0x4] sm:$0x1]
    %v666 = vmul.f32 %v655, %v630
    %v667 = vrot.slane %v666, 4
    %v668 = vadd.f32 %v666, %v667
    %v669 = vrot.slane %v668, 2
    %v670 = vadd.f32 %v668, %v669
    %v671 = vrot.slane %v670, 1
    %v672 = vadd.f32 %v670, %v671
    %v673 = vadd.f32 %v665, %v672
    %674 = vst [vmem:[#allocation8 + $0x4] sm:$0x1] %v673
    %v675 = vmul.f32 %v634, %v172
    %v676 = vld [vmem:[#allocation8 + $0x2] sm:$0x1]
    %v677 = vrot.slane %v675, 4
    %v678 = vadd.f32 %v675, %v677
    %v679 = vrot.slane %v678, 2
    %v680 = vadd.f32 %v678, %v679
    %v681 = vrot.slane %v680, 1
    %v682 = vadd.f32 %v680, %v681
    %v683 = vadd.f32 %v676, %v682
    %684 = vst [vmem:[#allocation8 + $0x2] sm:$0x1] %v683
    %v685 = vld [vmem:[#allocation8 + $0x5] sm:$0x1]
    %v686 = vmul.f32 %v675, %v634
    %v687 = vrot.slane %v686, 4
    %v688 = vadd.f32 %v686, %v687
    %v689 = vrot.slane %v688, 2
    %v690 = vadd.f32 %v688, %v689
    %v691 = vrot.slane %v690, 1
    %v692 = vadd.f32 %v690, %v691
    %v693 = vadd.f32 %v685, %v692
    %694 = vst [vmem:[#allocation8 + $0x5] sm:$0x1] %v693
    %v695 = vld [vmem:[%s142] sm:$0xff]
    %s696 = sld [smem:[#allocation7]]
    %v697 = vstv %s696
    %v698 = vmul.f32 %v697, %v695
    %s699 = sld [smem:[#allocation7 + $0x9]]
    %v700 = vstv %s699
    %v701 = vmul.f32 %v700, %v695
    %s702 = sld [smem:[#allocation7 + $0x12]]
    %v703 = vstv %s702
    %v704 = vmul.f32 %v703, %v695
    %v705 = vld [vmem:[%s120] sm:$0xff]
    %s706 = sld [smem:[#allocation7 + $0x1]]
    %v707 = vstv %s706
    %v708 = vmul.f32 %v707, %v705
    %v709 = vadd.f32 %v698, %v708
    %s710 = sld [smem:[#allocation7 + $0xa]]
    %v711 = vstv %s710
    %v712 = vmul.f32 %v711, %v705
    %v713 = vadd.f32 %v701, %v712
    %s714 = sld [smem:[#allocation7 + $0x13]]
    %v715 = vstv %s714
    %v716 = vmul.f32 %v715, %v705
    %v717 = vadd.f32 %v704, %v716
    %v718 = vld [vmem:[%s151] sm:$0xff]
    %s719 = sld [smem:[#allocation7 + $0x2]]
    %v720 = vstv %s719
    %v721 = vmul.f32 %v720, %v718
    %v722 = vadd.f32 %v709, %v721
    %s723 = sld [smem:[#allocation7 + $0xb]]
    %v724 = vstv %s723
    %v725 = vmul.f32 %v724, %v718
    %v726 = vadd.f32 %v713, %v725
    %s727 = sld [smem:[#allocation7 + $0x14]]
    %v728 = vstv %s727
    %v729 = vmul.f32 %v728, %v718
    %v730 = vadd.f32 %v717, %v729
    %v731 = vld [vmem:[%s98] sm:$0xff]
    %s732 = sld [smem:[#allocation7 + $0x3]]
    %v733 = vstv %s732
    %v734 = vmul.f32 %v733, %v731
    %v735 = vadd.f32 %v722, %v734
    %s736 = sld [smem:[#allocation7 + $0xc]]
    %v737 = vstv %s736
    %v738 = vmul.f32 %v737, %v731
    %v739 = vadd.f32 %v726, %v738
    %s740 = sld [smem:[#allocation7 + $0x15]]
    %v741 = vstv %s740
    %v742 = vmul.f32 %v741, %v731
    %v743 = vadd.f32 %v730, %v742
    %v744 = vld [vmem:[%s76] sm:$0xff]
    %s745 = sld [smem:[#allocation7 + $0x4]]
    %v746 = vstv %s745
    %v747 = vmul.f32 %v746, %v744
    %v748 = vadd.f32 %v735, %v747
    %s749 = sld [smem:[#allocation7 + $0xd]]
    %v750 = vstv %s749
    %v751 = vmul.f32 %v750, %v744
    %v752 = vadd.f32 %v739, %v751
    %s753 = sld [smem:[#allocation7 + $0x16]]
    %v754 = vstv %s753
    %v755 = vmul.f32 %v754, %v744
    %v756 = vadd.f32 %v743, %v755
    %v757 = vld [vmem:[%s107] sm:$0xff]
    %s758 = sld [smem:[#allocation7 + $0x5]]
    %v759 = vstv %s758
    %v760 = vmul.f32 %v759, %v757
    %v761 = vadd.f32 %v748, %v760
    %s762 = sld [smem:[#allocation7 + $0xe]]
    %v763 = vstv %s762
    %v764 = vmul.f32 %v763, %v757
    %v765 = vadd.f32 %v752, %v764
    %s766 = sld [smem:[#allocation7 + $0x17]]
    %v767 = vstv %s766
    %v768 = vmul.f32 %v767, %v757
    %v769 = vadd.f32 %v756, %v768
    %v770 = vld [vmem:[%s160] sm:$0xff]
    %s771 = sld [smem:[#allocation7 + $0x6]]
    %v772 = vstv %s771
    %v773 = vmul.f32 %v772, %v770
    %v774 = vadd.f32 %v761, %v773
    %s775 = sld [smem:[#allocation7 + $0xf]]
    %v776 = vstv %s775
    %v777 = vmul.f32 %v776, %v770
    %v778 = vadd.f32 %v765, %v777
    %s779 = sld [smem:[#allocation7 + $0x18]]
    %v780 = vstv %s779
    %v781 = vmul.f32 %v780, %v770
    %v782 = vadd.f32 %v769, %v781
    %v783 = vld [vmem:[%s138] sm:$0xff]
    %s784 = sld [smem:[#allocation7 + $0x7]]
    %v785 = vstv %s784
    %v786 = vmul.f32 %v785, %v783
    %v787 = vadd.f32 %v774, %v786
    %s788 = sld [smem:[#allocation7 + $0x10]]
    %v789 = vstv %s788
    %v790 = vmul.f32 %v789, %v783
    %v791 = vadd.f32 %v778, %v790
    %s792 = sld [smem:[#allocation7 + $0x19]]
    %v793 = vstv %s792
    %v794 = vmul.f32 %v793, %v783
    %v795 = vadd.f32 %v782, %v794
    %v796 = vld [vmem:[%s169] sm:$0xff]
    %s797 = sld [smem:[#allocation7 + $0x8]]
    %v798 = vstv %s797
    %v799 = vmul.f32 %v798, %v796
    %v800 = vadd.f32 %v787, %v799
    %s801 = sld [smem:[#allocation7 + $0x11]]
    %v802 = vstv %s801
    %v803 = vmul.f32 %v802, %v796
    %v804 = vadd.f32 %v791, %v803
    %s805 = sld [smem:[#allocation7 + $0x1a]]
    %v806 = vstv %s805
    %v807 = vmul.f32 %v806, %v796
    %v808 = vadd.f32 %v795, %v807
    %v809 = vmul.f32 %v800, %v172
    %v810 = vld [vmem:[#allocation8] sm:$0x1]
    %v811 = vrot.slane %v809, 4
    %v812 = vadd.f32 %v809, %v811
    %v813 = vrot.slane %v812, 2
    %v814 = vadd.f32 %v812, %v813
    %v815 = vrot.slane %v814, 1
    %v816 = vadd.f32 %v814, %v815
    %v817 = vadd.f32 %v810, %v816
    %818 = vst [vmem:[#allocation8] sm:$0x1] %v817
    %v819 = vld [vmem:[#allocation8 + $0x3] sm:$0x1]
    %v820 = vmul.f32 %v809, %v800
    %v821 = vrot.slane %v820, 4
    %v822 = vadd.f32 %v820, %v821
    %v823 = vrot.slane %v822, 2
    %v824 = vadd.f32 %v822, %v823
    %v825 = vrot.slane %v824, 1
    %v826 = vadd.f32 %v824, %v825
    %v827 = vadd.f32 %v819, %v826
    %828 = vst [vmem:[#allocation8 + $0x3] sm:$0x1] %v827
    %v829 = vmul.f32 %v804, %v172
    %v830 = vld [vmem:[#allocation8 + $0x1] sm:$0x1]
    %v831 = vrot.slane %v829, 4
    %v832 = vadd.f32 %v829, %v831
    %v833 = vrot.slane %v832, 2
    %v834 = vadd.f32 %v832, %v833
    %v835 = vrot.slane %v834, 1
    %v836 = vadd.f32 %v834, %v835
    %v837 = vadd.f32 %v830, %v836
    %838 = vst [vmem:[#allocation8 + $0x1] sm:$0x1] %v837
    %v839 = vld [vmem:[#allocation8 + $0x4] sm:$0x1]
    %v840 = vmul.f32 %v829, %v804
    %v841 = vrot.slane %v840, 4
    %v842 = vadd.f32 %v840, %v841
    %v843 = vrot.slane %v842, 2
    %v844 = vadd.f32 %v842, %v843
    %v845 = vrot.slane %v844, 1
    %v846 = vadd.f32 %v844, %v845
    %v847 = vadd.f32 %v839, %v846
    %848 = vst [vmem:[#allocation8 + $0x4] sm:$0x1] %v847
    %v849 = vmul.f32 %v808, %v172
    %v850 = vld [vmem:[#allocation8 + $0x2] sm:$0x1]
    %v851 = vrot.slane %v849, 4
    %v852 = vadd.f32 %v849, %v851
    %v853 = vrot.slane %v852, 2
    %v854 = vadd.f32 %v852, %v853
    %v855 = vrot.slane %v854, 1
    %v856 = vadd.f32 %v854, %v855
    %v857 = vadd.f32 %v850, %v856
    %858 = vst [vmem:[#allocation8 + $0x2] sm:$0x1] %v857
    %v859 = vld [vmem:[#allocation8 + $0x5] sm:$0x1]
    %v860 = vmul.f32 %v849, %v808
    %v861 = vrot.slane %v860, 4
    %v862 = vadd.f32 %v860, %v861
    %v863 = vrot.slane %v862, 2
    %v864 = vadd.f32 %v862, %v863
    %v865 = vrot.slane %v864, 1
    %v866 = vadd.f32 %v864, %v865
    %v867 = vadd.f32 %v859, %v866
    %868 = vst [vmem:[#allocation8 + $0x5] sm:$0x1] %v867
    // Predicated region
    $region22: #{tpu_custom_call.1} parent=1 // pred_check
      _
    $region23: #{tpu_custom_call.1} parent=1 // pred_check_branch
      %870 = sbr.rel (0) target = $region25
    $region24: #{tpu_custom_call.1} parent=1 // pred_region
      %s872 = ssub.s32 128, 128
      %873 = vsyncadd [#allocation5], %s872
      %s875 = sshll.u32 [#allocation8], 4
      %s876 = int_to_ptr.vmem [resolvable:$true] %s875
      %878 = dma.vmem_to_hbm [thread:$0]  %s876, 128, %s2, [#allocation5]
    $region25: #{tpu_custom_call.1} parent=1 // pred_fallthru
      _
    // Predicated region
    $region26: #{tpu_custom_call.1} parent=1 // pred_check
      _
    $region27: #{tpu_custom_call.1} parent=1 // pred_check_branch
      %880 = sbr.rel (0) target = $region29
    $region28: #{tpu_custom_call.1} parent=1 // pred_region
      %881 = dma.done [#allocation5], 128
    $region29: #{tpu_custom_call.1} parent=1 // pred_fallthru
      _
    %882 = vsyncpa [#allocation4], 1
    %883 = vsyncpa [#allocation5], 1
    %884 = vsyncpa [#allocation6], 1

</llo_original>
